<compile_context>
chip_gen: v6e
topology: v6e:2x2x1
jax: 0.10.0
libtpu: 0.0.40
codegen_flags: <defaults>
</compile_context>

<pallas_src>
import jax
import jax.numpy as jnp
from jax import lax
from jax.experimental import pallas as pl
from jax.experimental.pallas import tpu as pltpu

B, S, H = 2, 8, 32            # batch, seq_length, hidden_size
NH, HD = 4, 8                 # heads_num, attention_head_size (= H // NH)
FF = 64                       # feedforward_size
EPS = 1e-6                    # layernorm_eps
SCALE = 1.0 / (HD ** 0.5)     # with_scale=True (folded into the Q projection)
NHS = NH * S                  # lane width of the merged per-head score layout
OUT_ROWS = (S * H) // 128     # lane-dense output rows per batch element
PACK = 128 // H               # hidden rows packed per 128-lane output row


# ---------------- parameter-blob layout (shared by packer and kernel) ----------------------

def _build_layout():
    """Sublane-row layout of the single (rows,128) parameter blob (every item at lane offset 0)."""
    layout, r = {}, 0

    def add(name, rows, cols):
        nonlocal r
        layout[name] = (r, rows, cols)
        r += rows

    for pre in ("self", "ctx"):
        for n in ("wq", "wk", "wv", "wo"):
            add(f"{pre}_{n}", H, H)
    add("w1", H, FF)
    add("w2", FF, H)
    add("mask_hv", NHS, H)        # head block-diagonal selector for K/V expansion
    add("ones_seg", NHS, NHS)     # per-head-segment ones for the softmax denominators
    for pre in ("self", "ctx"):
        for n in ("bq", "bk", "bv", "bo"):
            add(f"{pre}_{n}", 1, H)
    add("b1", 1, FF)
    add("b2", 1, H)
    for i in (1, 2, 3):
        add(f"ln{i}_g", 1, H)
        add(f"ln{i}_b", 1, H)
    return layout, ((r + 7) // 8) * 8    # pad total rows to a sublane multiple


_LAYOUT, _PROWS = _build_layout()


def _gelu_fast(x):
    return 0.5 * x * (1.0 + jnp.tanh(0.7978845608028654 * x * (1.0 + 0.044715 * x * x)))


# ---------------- Pallas kernel: one batch element per grid step ---------------------------

def decoder_layer_kernel(acts_ref, bias_ref, params_ref, out_ref):
    x = acts_ref[0]                      # (S,H) decoder hidden of this batch element
    e = acts_ref[1]                      # (S,H) encoder hidden of this batch element

    def W(name):                         # (rows, cols) weight tile, lane offset 0
        r0, rows, cols = _LAYOUT[name]
        return params_ref[r0:r0 + rows, 0:cols]

    def V(name):                         # (1, cols) row vector (broadcasts over sublanes)
        r0, _, cols = _LAYOUT[name]
        return params_ref[r0:r0 + 1, 0:cols]

    mask_hv = W("mask_hv")               # (NHS,H): 1 where the row's head == the lane's head
    ones_seg = W("ones_seg")             # (NHS,NHS): 1 inside each SxS head segment

    def attend(xq, xkv, bias, pre):
        # Projections (attention scale already folded into wq/bq); three separate (H,H) matmuls so
        # every operand/result starts at lane 0 (no 32-lane carving of a fused QKV output).
        q = jnp.dot(xq, W(pre + "_wq"), preferred_element_type=jnp.float32) + V(pre + "_bq")
        k = jnp.dot(xkv, W(pre + "_wk"), preferred_element_type=jnp.float32) + V(pre + "_bk")
        v = jnp.dot(xkv, W(pre + "_wv"), preferred_element_type=jnp.float32) + V(pre + "_bv")
        # Head-block-diagonal expansion: row h*S+s of k_bd / v_bd holds k/v row s restricted to head
        # h's lanes, so a single matmul covers all heads with no cross-head mixing.
        k_bd = jnp.concatenate([k] * NH, axis=0) * mask_hv           # (NHS,H)
        v_bd = jnp.concatenate([v] * NH, axis=0) * mask_hv           # (NHS,H)
        s = lax.dot_general(q, k_bd, (((1,), (1,)), ((), ())),
                            preferred_element_type=jnp.float32) + bias      # (S,NHS)
        # Softmax per S-lane head segment; a shared per-row shift is valid (shift invariance).
        p = jnp.exp(s - jnp.max(s, axis=-1, keepdims=True))
        denom = jnp.dot(p, ones_seg, preferred_element_type=jnp.float32)    # per-segment sums
        probs = p * pl.reciprocal(denom, approx=True)                       # attn dropout = identity
        ctx = jnp.dot(probs, v_bd, preferred_element_type=jnp.float32)      # (S,H) head-major lanes
        return jnp.dot(ctx, W(pre + "_wo"), preferred_element_type=jnp.float32) + V(pre + "_bo")

    def layer_norm(y, idx):
        # TencentPretrain "normal" LayerNorm: gamma*(y-mean)/(std_unbiased+eps)+beta
        mu = jnp.mean(y, axis=-1, keepdims=True)
        d = y - mu
        var = jnp.sum(d * d, axis=-1, keepdims=True) * (1.0 / (H - 1))
        inv = pl.reciprocal(jnp.sqrt(var) + EPS)
        return V(f"ln{idx}_g") * (d * inv) + V(f"ln{idx}_b")

    # ---- self attention + post-LN (dropout_1 = identity in eval mode) ----
    query = attend(x, x, bias_ref[0], "self")
    query_norm = layer_norm(query + x, 1)
    # ---- cross attention (key/value = encoder hidden) + post-LN (dropout_2 = identity) ----
    mid = attend(query_norm, e, bias_ref[1], "ctx")
    mid_norm = layer_norm(mid + query_norm, 2)
    # ---- dense feed forward with gelu_fast + post-LN (dropout_3 = identity) ----
    inter = _gelu_fast(jnp.dot(mid_norm, W("w1"), preferred_element_type=jnp.float32) + V("b1"))
    ff = jnp.dot(inter, W("w2"), preferred_element_type=jnp.float32) + V("b2")
    y = layer_norm(ff + mid_norm, 3)                                   # (S,H)

    # Lane-dense store: pack PACK=4 hidden rows into each 128-lane output row (no masked vst).
    packed = jnp.concatenate(
        [jnp.concatenate([y[r * PACK + j:r * PACK + j + 1, :] for j in range(PACK)], axis=1)
         for r in range(OUT_ROWS)], axis=0)                            # (OUT_ROWS,128)
    out_ref[...] = packed


# ---------------- one-time (hoisted) parameter packing -------------------------------------

def pack_decoder_params(params):
    """Call-invariant packing: fold the attention scale into Wq/bq and lay every weight, bias, LN
    vector and block-diag constant out in a single lane-dense (rows,128) f32 slab (one prologue DMA,
    sublane-row addressed inside the kernel).  In a real model this runs once at parameter load."""
    self_w, self_b, ctx_w, ctx_b, w1, b1, w2, b2, ln_g, ln_b = params

    # TODO(synk): scale is applied to q.k^T only (mask/position bias added unscaled); verify once
    # against the exact TencentPretrain MultiHeadedAttention scale-vs-position-bias ordering.
    row_head = jnp.arange(NHS)[:, None] // S
    entries = {
        "self_wq": self_w[0] * SCALE, "self_wk": self_w[1], "self_wv": self_w[2], "self_wo": self_w[3],
        "ctx_wq": ctx_w[0] * SCALE, "ctx_wk": ctx_w[1], "ctx_wv": ctx_w[2], "ctx_wo": ctx_w[3],
        "w1": w1, "w2": w2,
        "mask_hv": (row_head == jnp.arange(H)[None, :] // HD).astype(jnp.float32),
        "ones_seg": (row_head == jnp.arange(NHS)[None, :] // S).astype(jnp.float32),
        "self_bq": self_b[0] * SCALE, "self_bk": self_b[1], "self_bv": self_b[2], "self_bo": self_b[3],
        "ctx_bq": ctx_b[0] * SCALE, "ctx_bk": ctx_b[1], "ctx_bv": ctx_b[2], "ctx_bo": ctx_b[3],
        "b1": b1, "b2": b2,
        "ln1_g": ln_g[0], "ln1_b": ln_b[0],
        "ln2_g": ln_g[1], "ln2_b": ln_b[1],
        "ln3_g": ln_g[2], "ln3_b": ln_b[2],
    }
    blob = jnp.zeros((_PROWS, 128), jnp.float32)
    for name, val in entries.items():
        r0, rows, cols = _LAYOUT[name]
        blob = blob.at[r0:r0 + rows, 0:cols].set(jnp.asarray(val, jnp.float32).reshape(rows, cols))
    return blob


# ---------------- per-call wrapper ----------------------------------------------------------

def _merged_bias(mask, pos_bias):
    # mask: (B,1,S,S) additive; pos_bias: (1,NH,S,S) -> (B,S,NH*S) with lanes ordered
    # [head0 keys | head1 keys | ...], matching the merged score layout.
    comb = mask[:, 0][:, None, :, :] + pos_bias[0][None, :, :, :]      # (B,NH,S,S)
    return comb.transpose(0, 2, 1, 3).reshape(B, S, NHS)


@jax.jit
def transformer_decoder_layer(hidden, encoder_hidden, mask_decoder, mask_encoder,
                              self_pos_bias, ctx_pos_bias, packed_params):
    # per-call packing is limited to the activations and the (mask + position-bias) slabs
    acts = jnp.stack([hidden, encoder_hidden])                          # (2,B,S,H)
    bias = jnp.stack([_merged_bias(mask_decoder, self_pos_bias),
                      _merged_bias(mask_encoder, ctx_pos_bias)])        # (2,B,S,NHS)

    grid_spec = pltpu.PrefetchScalarGridSpec(
        num_scalar_prefetch=0,
        grid=(B,),                                  # batch-parallel: one TC per element on v7x
        in_specs=[
            pl.BlockSpec((2, None, S, H), lambda b: (0, b, 0, 0)),
            pl.BlockSpec((2, None, S, NHS), lambda b: (0, b, 0, 0)),
            pl.BlockSpec((_PROWS, 128), lambda b: (0, 0)),   # same block each step -> fetched once
        ],
        out_specs=pl.BlockSpec((None, OUT_ROWS, 128), lambda b: (b, 0, 0)),
    )
    out = pl.pallas_call(
        decoder_layer_kernel,
        out_shape=jax.ShapeDtypeStruct((B, OUT_ROWS, 128), jnp.float32),
        grid_spec=grid_spec,
        compiler_params=pltpu.CompilerParams(dimension_semantics=("parallel",)),
    )(acts, bias, packed_params)
    return out.reshape(B, S, H)


# ---------------- independent pure-JAX reference (mirrors the PyTorch forward) -------------

def reference(hidden, enc, mask_dec, mask_enc, self_pb, ctx_pb, params):
    self_w, self_b, ctx_w, ctx_b, w1, b1, w2, b2, ln_g, ln_b = params

    def layer_norm(x, gamma, beta):
        mu = x.mean(-1, keepdims=True)
        std = jnp.sqrt(jnp.var(x, axis=-1, keepdims=True, ddof=1))
        return gamma * (x - mu) / (std + EPS) + beta

    def gelu_fast(x):
        return 0.5 * x * (1.0 + jnp.tanh(0.7978845608028654 * x * (1.0 + 0.044715 * x * x)))

    def mha(x_q, x_kv, mask, pos_bias, Wm, Bv):
        q = x_q @ Wm[0] + Bv[0]
        k = x_kv @ Wm[1] + Bv[1]
        v = x_kv @ Wm[2] + Bv[2]
        split = lambda t: t.reshape(B, S, NH, HD).transpose(0, 2, 1, 3)
        qh, kh, vh = split(q), split(k), split(v)
        scores = jnp.einsum("bhqd,bhkd->bhqk", qh, kh) * SCALE + mask + pos_bias
        probs = jax.nn.softmax(scores, axis=-1)
        ctx = jnp.einsum("bhqk,bhkd->bhqd", probs, vh)
        ctx = ctx.transpose(0, 2, 1, 3).reshape(B, S, H)
        return ctx @ Wm[3] + Bv[3]

    query = mha(hidden, hidden, mask_dec, self_pb, self_w, self_b)
    qn = layer_norm(query + hidden, ln_g[0], ln_b[0])
    mid = mha(qn, enc, mask_enc, ctx_pb, ctx_w, ctx_b)
    mn = layer_norm(mid + qn, ln_g[1], ln_b[1])
    out = gelu_fast(mn @ w1 + b1) @ w2 + b2
    return layer_norm(out + mn, ln_g[2], ln_b[2])


if __name__ == "__main__":
    key = jax.random.PRNGKey(0)
    ks = jax.random.split(key, 16)
    w = 0.05  # weight init scale

    hidden = jax.random.normal(ks[0], (B, S, H), jnp.float32)
    encoder_hidden = jax.random.normal(ks[1], (B, S, H), jnp.float32)

    causal = jnp.tril(jnp.ones((S, S), jnp.float32))
    mask_decoder = jnp.broadcast_to(((1.0 - causal) * -10000.0)[None, None], (B, 1, S, S))
    mask_encoder = jnp.zeros((B, 1, S, S), jnp.float32)

    self_pos_bias = w * jax.random.normal(ks[2], (1, NH, S, S), jnp.float32)
    ctx_pos_bias = w * jax.random.normal(ks[3], (1, NH, S, S), jnp.float32)

    self_w = w * jax.random.normal(ks[4], (4, H, H), jnp.float32)   # [Wq,Wk,Wv,Wo] as (in,out)
    self_b = w * jax.random.normal(ks[5], (4, H), jnp.float32)
    ctx_w = w * jax.random.normal(ks[6], (4, H, H), jnp.float32)
    ctx_b = w * jax.random.normal(ks[7], (4, H), jnp.float32)
    w1 = w * jax.random.normal(ks[8], (H, FF), jnp.float32)
    b1 = w * jax.random.normal(ks[9], (FF,), jnp.float32)
    w2 = w * jax.random.normal(ks[10], (FF, H), jnp.float32)
    b2 = w * jax.random.normal(ks[11], (H,), jnp.float32)
    ln_g = 1.0 + 0.1 * jax.random.normal(ks[12], (3, H), jnp.float32)
    ln_b = 0.05 * jax.random.normal(ks[13], (3, H), jnp.float32)

    params = (self_w, self_b, ctx_w, ctx_b, w1, b1, w2, b2, ln_g, ln_b)

    packed_params = pack_decoder_params(params)   # one-time, hoisted out of the per-call path

    out = transformer_decoder_layer(hidden, encoder_hidden, mask_decoder, mask_encoder,
                                    self_pos_bias, ctx_pos_bias, packed_params)
    out = jax.block_until_ready(out)

    ref = reference(hidden, encoder_hidden, mask_decoder, mask_encoder,
                    self_pos_bias, ctx_pos_bias, params)
    assert out.shape == (B, S, H)
    # tolerance loosened from 1e-4 to 2e-3 solely to cover pl.reciprocal(approx=True) in softmax
    assert jnp.allclose(out, ref, rtol=2e-3, atol=2e-3), "mismatch vs JAX reference"

    # TODO(synk): dropout_1/2/3 and attention dropout are treated as eval-mode identities.
    print("KERNEL_OK")
</pallas_src>

<mosaic_0001>
module attributes {stable_mosaic.version = 11 : i64} {
  func.func @decoder_layer_kernel(%arg0: i32, %arg1: memref<2x1x8x32xf32, #tpu.memory_space<vmem>>, %arg2: memref<2x1x8x32xf32, #tpu.memory_space<vmem>>, %arg3: memref<432x128xf32, #tpu.memory_space<vmem>>, %arg4: memref<1x2x128xf32, #tpu.memory_space<vmem>>) attributes {dimension_semantics = [#tpu.dimension_semantics<parallel>], iteration_bounds = array<i64: 2>, scalar_prefetch = 0 : i64, scratch_operands = 0 : i64, tpu.core_type = #tpu.core_type<tc>, window_params = [{transform_indices = @transform_0, window_bounds = array<i64: 2, 1, 8, 32>}, {transform_indices = @transform_1, window_bounds = array<i64: 2, 1, 8, 32>}, {pipeline_mode = #tpu.pipeline_mode<synchronous>, transform_indices = @transform_2, window_bounds = array<i64: 432, 128>}, {transform_indices = @transform_3, window_bounds = array<i64: 1, 2, 128>}]} {
    %c0 = arith.constant 0 : index
    %c0_0 = arith.constant 0 : index
    %c0_1 = arith.constant 0 : index
    %c0_2 = arith.constant 0 : index
    %0 = vector.load %arg1[%c0, %c0_0, %c0_1, %c0_2] : memref<2x1x8x32xf32, #tpu.memory_space<vmem>>, vector<1x1x8x32xf32>
    %1 = vector.shape_cast %0 : vector<1x1x8x32xf32> to vector<8x32xf32>
    %c1 = arith.constant 1 : index
    %c0_3 = arith.constant 0 : index
    %c0_4 = arith.constant 0 : index
    %c0_5 = arith.constant 0 : index
    %2 = vector.load %arg1[%c1, %c0_3, %c0_4, %c0_5] : memref<2x1x8x32xf32, #tpu.memory_space<vmem>>, vector<1x1x8x32xf32>
    %3 = vector.shape_cast %2 : vector<1x1x8x32xf32> to vector<8x32xf32>
    %c352 = arith.constant 352 : index
    %c0_6 = arith.constant 0 : index
    %4 = vector.load %arg3[%c352, %c0_6] : memref<432x128xf32, #tpu.memory_space<vmem>>, vector<32x32xf32>
    %c384 = arith.constant 384 : index
    %c0_7 = arith.constant 0 : index
    %5 = vector.load %arg3[%c384, %c0_7] : memref<432x128xf32, #tpu.memory_space<vmem>>, vector<32x32xf32>
    %c0_8 = arith.constant 0 : index
    %c0_9 = arith.constant 0 : index
    %c0_10 = arith.constant 0 : index
    %c0_11 = arith.constant 0 : index
    %6 = vector.load %arg2[%c0_8, %c0_9, %c0_10, %c0_11] : memref<2x1x8x32xf32, #tpu.memory_space<vmem>>, vector<1x1x8x32xf32>
    %7 = vector.shape_cast %6 : vector<1x1x8x32xf32> to vector<8x32xf32>
    %c0_12 = arith.constant 0 : index
    %c0_13 = arith.constant 0 : index
    %8 = vector.load %arg3[%c0_12, %c0_13] : memref<432x128xf32, #tpu.memory_space<vmem>>, vector<32x32xf32>
    %cst = arith.constant dense<0.000000e+00> : vector<8x32xf32>
    %9 = tpu.matmul %1, %8, %cst {dimension_numbers = #tpu.dot_dimension_numbers<[1], [0], [0], [1], [0, 0, 1, 1], [], []>} : vector<8x32xf32>, vector<32x32xf32>, vector<8x32xf32> -> vector<8x32xf32>
    %c416 = arith.constant 416 : index
    %c0_14 = arith.constant 0 : index
    %10 = vector.load %arg3[%c416, %c0_14] : memref<432x128xf32, #tpu.memory_space<vmem>>, vector<1x32xf32>
    %11 = vector.broadcast %10 : vector<1x32xf32> to vector<8x32xf32>
    %12 = arith.addf %9, %11 : vector<8x32xf32>
    %c32 = arith.constant 32 : index
    %c0_15 = arith.constant 0 : index
    %13 = vector.load %arg3[%c32, %c0_15] : memref<432x128xf32, #tpu.memory_space<vmem>>, vector<32x32xf32>
    %cst_16 = arith.constant dense<0.000000e+00> : vector<8x32xf32>
    %14 = tpu.matmul %1, %13, %cst_16 {dimension_numbers = #tpu.dot_dimension_numbers<[1], [0], [0], [1], [0, 0, 1, 1], [], []>} : vector<8x32xf32>, vector<32x32xf32>, vector<8x32xf32> -> vector<8x32xf32>
    %c417 = arith.constant 417 : index
    %c0_17 = arith.constant 0 : index
    %15 = vector.load %arg3[%c417, %c0_17] : memref<432x128xf32, #tpu.memory_space<vmem>>, vector<1x32xf32>
    %16 = vector.broadcast %15 : vector<1x32xf32> to vector<8x32xf32>
    %17 = arith.addf %14, %16 : vector<8x32xf32>
    %c64 = arith.constant 64 : index
    %c0_18 = arith.constant 0 : index
    %18 = vector.load %arg3[%c64, %c0_18] : memref<432x128xf32, #tpu.memory_space<vmem>>, vector<32x32xf32>
    %cst_19 = arith.constant dense<0.000000e+00> : vector<8x32xf32>
    %19 = tpu.matmul %1, %18, %cst_19 {dimension_numbers = #tpu.dot_dimension_numbers<[1], [0], [0], [1], [0, 0, 1, 1], [], []>} : vector<8x32xf32>, vector<32x32xf32>, vector<8x32xf32> -> vector<8x32xf32>
    %c418 = arith.constant 418 : index
    %c0_20 = arith.constant 0 : index
    %20 = vector.load %arg3[%c418, %c0_20] : memref<432x128xf32, #tpu.memory_space<vmem>>, vector<1x32xf32>
    %21 = vector.broadcast %20 : vector<1x32xf32> to vector<8x32xf32>
    %22 = arith.addf %19, %21 : vector<8x32xf32>
    %23 = tpu.concatenate %17, %17, %17, %17 in 0 : vector<8x32xf32>, vector<8x32xf32>, vector<8x32xf32>, vector<8x32xf32> -> vector<32x32xf32>
    %24 = arith.mulf %23, %4 : vector<32x32xf32>
    %25 = tpu.concatenate %22, %22, %22, %22 in 0 : vector<8x32xf32>, vector<8x32xf32>, vector<8x32xf32>, vector<8x32xf32> -> vector<32x32xf32>
    %26 = arith.mulf %25, %4 : vector<32x32xf32>
    %cst_21 = arith.constant dense<0.000000e+00> : vector<8x32xf32>
    %27 = tpu.matmul %12, %24, %cst_21 {dimension_numbers = #tpu.dot_dimension_numbers<[1], [1], [0], [0], [0, 0, 1, 0], [], []>} : vector<8x32xf32>, vector<32x32xf32>, vector<8x32xf32> -> vector<8x32xf32>
    %28 = arith.addf %27, %7 : vector<8x32xf32>
    %cst_22 = arith.constant dense<0xFF800000> : vector<8xf32>
    %29 = vector.multi_reduction <maximumf>, %28, %cst_22 [1] : vector<8x32xf32> to vector<8xf32>
    %30 = vector.shape_cast %29 : vector<8xf32> to vector<8x1xf32>
    %31 = vector.broadcast %30 : vector<8x1xf32> to vector<8x32xf32>
    %32 = arith.subf %28, %31 : vector<8x32xf32>
    %33 = math.exp %32 : vector<8x32xf32>
    %cst_23 = arith.constant dense<0.000000e+00> : vector<8x32xf32>
    %34 = tpu.matmul %33, %5, %cst_23 {dimension_numbers = #tpu.dot_dimension_numbers<[1], [0], [0], [1], [0, 0, 1, 1], [], []>} : vector<8x32xf32>, vector<32x32xf32>, vector<8x32xf32> -> vector<8x32xf32>
    %35 = tpu.reciprocal %34 {approx = true} : vector<8x32xf32> -> vector<8x32xf32>
    %36 = arith.mulf %33, %35 : vector<8x32xf32>
    %cst_24 = arith.constant dense<0.000000e+00> : vector<8x32xf32>
    %37 = tpu.matmul %36, %26, %cst_24 {dimension_numbers = #tpu.dot_dimension_numbers<[1], [0], [0], [1], [0, 0, 1, 1], [], []>} : vector<8x32xf32>, vector<32x32xf32>, vector<8x32xf32> -> vector<8x32xf32>
    %c96 = arith.constant 96 : index
    %c0_25 = arith.constant 0 : index
    %38 = vector.load %arg3[%c96, %c0_25] : memref<432x128xf32, #tpu.memory_space<vmem>>, vector<32x32xf32>
    %cst_26 = arith.constant dense<0.000000e+00> : vector<8x32xf32>
    %39 = tpu.matmul %37, %38, %cst_26 {dimension_numbers = #tpu.dot_dimension_numbers<[1], [0], [0], [1], [0, 0, 1, 1], [], []>} : vector<8x32xf32>, vector<32x32xf32>, vector<8x32xf32> -> vector<8x32xf32>
    %c419 = arith.constant 419 : index
    %c0_27 = arith.constant 0 : index
    %40 = vector.load %arg3[%c419, %c0_27] : memref<432x128xf32, #tpu.memory_space<vmem>>, vector<1x32xf32>
    %41 = vector.broadcast %40 : vector<1x32xf32> to vector<8x32xf32>
    %42 = arith.addf %39, %41 : vector<8x32xf32>
    %43 = arith.addf %42, %1 : vector<8x32xf32>
    %cst_28 = arith.constant dense<0.000000e+00> : vector<8xf32>
    %44 = vector.multi_reduction <add>, %43, %cst_28 [1] : vector<8x32xf32> to vector<8xf32>
    %45 = vector.shape_cast %44 : vector<8xf32> to vector<8x1xf32>
    %cst_29 = arith.constant 3.200000e+01 : f32
    %46 = vector.broadcast %cst_29 : f32 to vector<8x1xf32>
    %47 = arith.divf %45, %46 : vector<8x1xf32>
    %48 = vector.broadcast %47 : vector<8x1xf32> to vector<8x32xf32>
    %49 = arith.subf %43, %48 : vector<8x32xf32>
    %50 = arith.mulf %49, %49 : vector<8x32xf32>
    %cst_30 = arith.constant dense<0.000000e+00> : vector<8xf32>
    %51 = vector.multi_reduction <add>, %50, %cst_30 [1] : vector<8x32xf32> to vector<8xf32>
    %52 = vector.shape_cast %51 : vector<8xf32> to vector<8x1xf32>
    %cst_31 = arith.constant 0.0322580636 : f32
    %53 = vector.broadcast %cst_31 : f32 to vector<8x1xf32>
    %54 = arith.mulf %52, %53 : vector<8x1xf32>
    %55 = math.sqrt %54 : vector<8x1xf32>
    %cst_32 = arith.constant 9.99999997E-7 : f32
    %56 = vector.broadcast %cst_32 : f32 to vector<8x1xf32>
    %57 = arith.addf %55, %56 : vector<8x1xf32>
    %58 = tpu.reciprocal %57 : vector<8x1xf32> -> vector<8x1xf32>
    %c426 = arith.constant 426 : index
    %c0_33 = arith.constant 0 : index
    %59 = vector.load %arg3[%c426, %c0_33] : memref<432x128xf32, #tpu.memory_space<vmem>>, vector<1x32xf32>
    %60 = vector.broadcast %58 : vector<8x1xf32> to vector<8x32xf32>
    %61 = arith.mulf %49, %60 : vector<8x32xf32>
    %62 = vector.broadcast %59 : vector<1x32xf32> to vector<8x32xf32>
    %63 = arith.mulf %62, %61 : vector<8x32xf32>
    %c427 = arith.constant 427 : index
    %c0_34 = arith.constant 0 : index
    %64 = vector.load %arg3[%c427, %c0_34] : memref<432x128xf32, #tpu.memory_space<vmem>>, vector<1x32xf32>
    %65 = vector.broadcast %64 : vector<1x32xf32> to vector<8x32xf32>
    %66 = arith.addf %63, %65 : vector<8x32xf32>
    %c1_35 = arith.constant 1 : index
    %c0_36 = arith.constant 0 : index
    %c0_37 = arith.constant 0 : index
    %c0_38 = arith.constant 0 : index
    %67 = vector.load %arg2[%c1_35, %c0_36, %c0_37, %c0_38] : memref<2x1x8x32xf32, #tpu.memory_space<vmem>>, vector<1x1x8x32xf32>
    %68 = vector.shape_cast %67 : vector<1x1x8x32xf32> to vector<8x32xf32>
    %c128 = arith.constant 128 : index
    %c0_39 = arith.constant 0 : index
    %69 = vector.load %arg3[%c128, %c0_39] : memref<432x128xf32, #tpu.memory_space<vmem>>, vector<32x32xf32>
    %cst_40 = arith.constant dense<0.000000e+00> : vector<8x32xf32>
    %70 = tpu.matmul %66, %69, %cst_40 {dimension_numbers = #tpu.dot_dimension_numbers<[1], [0], [0], [1], [0, 0, 1, 1], [], []>} : vector<8x32xf32>, vector<32x32xf32>, vector<8x32xf32> -> vector<8x32xf32>
    %c420 = arith.constant 420 : index
    %c0_41 = arith.constant 0 : index
    %71 = vector.load %arg3[%c420, %c0_41] : memref<432x128xf32, #tpu.memory_space<vmem>>, vector<1x32xf32>
    %72 = vector.broadcast %71 : vector<1x32xf32> to vector<8x32xf32>
    %73 = arith.addf %70, %72 : vector<8x32xf32>
    %c160 = arith.constant 160 : index
    %c0_42 = arith.constant 0 : index
    %74 = vector.load %arg3[%c160, %c0_42] : memref<432x128xf32, #tpu.memory_space<vmem>>, vector<32x32xf32>
    %cst_43 = arith.constant dense<0.000000e+00> : vector<8x32xf32>
    %75 = tpu.matmul %3, %74, %cst_43 {dimension_numbers = #tpu.dot_dimension_numbers<[1], [0], [0], [1], [0, 0, 1, 1], [], []>} : vector<8x32xf32>, vector<32x32xf32>, vector<8x32xf32> -> vector<8x32xf32>
    %c421 = arith.constant 421 : index
    %c0_44 = arith.constant 0 : index
    %76 = vector.load %arg3[%c421, %c0_44] : memref<432x128xf32, #tpu.memory_space<vmem>>, vector<1x32xf32>
    %77 = vector.broadcast %76 : vector<1x32xf32> to vector<8x32xf32>
    %78 = arith.addf %75, %77 : vector<8x32xf32>
    %c192 = arith.constant 192 : index
    %c0_45 = arith.constant 0 : index
    %79 = vector.load %arg3[%c192, %c0_45] : memref<432x128xf32, #tpu.memory_space<vmem>>, vector<32x32xf32>
    %cst_46 = arith.constant dense<0.000000e+00> : vector<8x32xf32>
    %80 = tpu.matmul %3, %79, %cst_46 {dimension_numbers = #tpu.dot_dimension_numbers<[1], [0], [0], [1], [0, 0, 1, 1], [], []>} : vector<8x32xf32>, vector<32x32xf32>, vector<8x32xf32> -> vector<8x32xf32>
    %c422 = arith.constant 422 : index
    %c0_47 = arith.constant 0 : index
    %81 = vector.load %arg3[%c422, %c0_47] : memref<432x128xf32, #tpu.memory_space<vmem>>, vector<1x32xf32>
    %82 = vector.broadcast %81 : vector<1x32xf32> to vector<8x32xf32>
    %83 = arith.addf %80, %82 : vector<8x32xf32>
    %84 = tpu.concatenate %78, %78, %78, %78 in 0 : vector<8x32xf32>, vector<8x32xf32>, vector<8x32xf32>, vector<8x32xf32> -> vector<32x32xf32>
    %85 = arith.mulf %84, %4 : vector<32x32xf32>
    %86 = tpu.concatenate %83, %83, %83, %83 in 0 : vector<8x32xf32>, vector<8x32xf32>, vector<8x32xf32>, vector<8x32xf32> -> vector<32x32xf32>
    %87 = arith.mulf %86, %4 : vector<32x32xf32>
    %cst_48 = arith.constant dense<0.000000e+00> : vector<8x32xf32>
    %88 = tpu.matmul %73, %85, %cst_48 {dimension_numbers = #tpu.dot_dimension_numbers<[1], [1], [0], [0], [0, 0, 1, 0], [], []>} : vector<8x32xf32>, vector<32x32xf32>, vector<8x32xf32> -> vector<8x32xf32>
    %89 = arith.addf %88, %68 : vector<8x32xf32>
    %cst_49 = arith.constant dense<0xFF800000> : vector<8xf32>
    %90 = vector.multi_reduction <maximumf>, %89, %cst_49 [1] : vector<8x32xf32> to vector<8xf32>
    %91 = vector.shape_cast %90 : vector<8xf32> to vector<8x1xf32>
    %92 = vector.broadcast %91 : vector<8x1xf32> to vector<8x32xf32>
    %93 = arith.subf %89, %92 : vector<8x32xf32>
    %94 = math.exp %93 : vector<8x32xf32>
    %cst_50 = arith.constant dense<0.000000e+00> : vector<8x32xf32>
    %95 = tpu.matmul %94, %5, %cst_50 {dimension_numbers = #tpu.dot_dimension_numbers<[1], [0], [0], [1], [0, 0, 1, 1], [], []>} : vector<8x32xf32>, vector<32x32xf32>, vector<8x32xf32> -> vector<8x32xf32>
    %96 = tpu.reciprocal %95 {approx = true} : vector<8x32xf32> -> vector<8x32xf32>
    %97 = arith.mulf %94, %96 : vector<8x32xf32>
    %cst_51 = arith.constant dense<0.000000e+00> : vector<8x32xf32>
    %98 = tpu.matmul %97, %87, %cst_51 {dimension_numbers = #tpu.dot_dimension_numbers<[1], [0], [0], [1], [0, 0, 1, 1], [], []>} : vector<8x32xf32>, vector<32x32xf32>, vector<8x32xf32> -> vector<8x32xf32>
    %c224 = arith.constant 224 : index
    %c0_52 = arith.constant 0 : index
    %99 = vector.load %arg3[%c224, %c0_52] : memref<432x128xf32, #tpu.memory_space<vmem>>, vector<32x32xf32>
    %cst_53 = arith.constant dense<0.000000e+00> : vector<8x32xf32>
    %100 = tpu.matmul %98, %99, %cst_53 {dimension_numbers = #tpu.dot_dimension_numbers<[1], [0], [0], [1], [0, 0, 1, 1], [], []>} : vector<8x32xf32>, vector<32x32xf32>, vector<8x32xf32> -> vector<8x32xf32>
    %c423 = arith.constant 423 : index
    %c0_54 = arith.constant 0 : index
    %101 = vector.load %arg3[%c423, %c0_54] : memref<432x128xf32, #tpu.memory_space<vmem>>, vector<1x32xf32>
    %102 = vector.broadcast %101 : vector<1x32xf32> to vector<8x32xf32>
    %103 = arith.addf %100, %102 : vector<8x32xf32>
    %104 = arith.addf %103, %66 : vector<8x32xf32>
    %cst_55 = arith.constant dense<0.000000e+00> : vector<8xf32>
    %105 = vector.multi_reduction <add>, %104, %cst_55 [1] : vector<8x32xf32> to vector<8xf32>
    %106 = vector.shape_cast %105 : vector<8xf32> to vector<8x1xf32>
    %cst_56 = arith.constant 3.200000e+01 : f32
    %107 = vector.broadcast %cst_56 : f32 to vector<8x1xf32>
    %108 = arith.divf %106, %107 : vector<8x1xf32>
    %109 = vector.broadcast %108 : vector<8x1xf32> to vector<8x32xf32>
    %110 = arith.subf %104, %109 : vector<8x32xf32>
    %111 = arith.mulf %110, %110 : vector<8x32xf32>
    %cst_57 = arith.constant dense<0.000000e+00> : vector<8xf32>
    %112 = vector.multi_reduction <add>, %111, %cst_57 [1] : vector<8x32xf32> to vector<8xf32>
    %113 = vector.shape_cast %112 : vector<8xf32> to vector<8x1xf32>
    %cst_58 = arith.constant 0.0322580636 : f32
    %114 = vector.broadcast %cst_58 : f32 to vector<8x1xf32>
    %115 = arith.mulf %113, %114 : vector<8x1xf32>
    %116 = math.sqrt %115 : vector<8x1xf32>
    %cst_59 = arith.constant 9.99999997E-7 : f32
    %117 = vector.broadcast %cst_59 : f32 to vector<8x1xf32>
    %118 = arith.addf %116, %117 : vector<8x1xf32>
    %119 = tpu.reciprocal %118 : vector<8x1xf32> -> vector<8x1xf32>
    %c428 = arith.constant 428 : index
    %c0_60 = arith.constant 0 : index
    %120 = vector.load %arg3[%c428, %c0_60] : memref<432x128xf32, #tpu.memory_space<vmem>>, vector<1x32xf32>
    %121 = vector.broadcast %119 : vector<8x1xf32> to vector<8x32xf32>
    %122 = arith.mulf %110, %121 : vector<8x32xf32>
    %123 = vector.broadcast %120 : vector<1x32xf32> to vector<8x32xf32>
    %124 = arith.mulf %123, %122 : vector<8x32xf32>
    %c429 = arith.constant 429 : index
    %c0_61 = arith.constant 0 : index
    %125 = vector.load %arg3[%c429, %c0_61] : memref<432x128xf32, #tpu.memory_space<vmem>>, vector<1x32xf32>
    %126 = vector.broadcast %125 : vector<1x32xf32> to vector<8x32xf32>
    %127 = arith.addf %124, %126 : vector<8x32xf32>
    %c256 = arith.constant 256 : index
    %c0_62 = arith.constant 0 : index
    %128 = vector.load %arg3[%c256, %c0_62] : memref<432x128xf32, #tpu.memory_space<vmem>>, vector<32x64xf32>
    %cst_63 = arith.constant dense<0.000000e+00> : vector<8x64xf32>
    %129 = tpu.matmul %127, %128, %cst_63 {dimension_numbers = #tpu.dot_dimension_numbers<[1], [0], [0], [1], [0, 0, 1, 1], [], []>} : vector<8x32xf32>, vector<32x64xf32>, vector<8x64xf32> -> vector<8x64xf32>
    %c424 = arith.constant 424 : index
    %c0_64 = arith.constant 0 : index
    %130 = vector.load %arg3[%c424, %c0_64] : memref<432x128xf32, #tpu.memory_space<vmem>>, vector<1x64xf32>
    %131 = vector.broadcast %130 : vector<1x64xf32> to vector<8x64xf32>
    %132 = arith.addf %129, %131 : vector<8x64xf32>
    %cst_65 = arith.constant 5.000000e-01 : f32
    %133 = vector.broadcast %cst_65 : f32 to vector<8x64xf32>
    %134 = arith.mulf %133, %132 : vector<8x64xf32>
    %cst_66 = arith.constant 0.797884583 : f32
    %135 = vector.broadcast %cst_66 : f32 to vector<8x64xf32>
    %136 = arith.mulf %135, %132 : vector<8x64xf32>
    %cst_67 = arith.constant 4.471500e-02 : f32
    %137 = vector.broadcast %cst_67 : f32 to vector<8x64xf32>
    %138 = arith.mulf %137, %132 : vector<8x64xf32>
    %139 = arith.mulf %138, %132 : vector<8x64xf32>
    %cst_68 = arith.constant 1.000000e+00 : f32
    %140 = vector.broadcast %cst_68 : f32 to vector<8x64xf32>
    %141 = arith.addf %140, %139 : vector<8x64xf32>
    %142 = arith.mulf %136, %141 : vector<8x64xf32>
    %143 = math.tanh %142 : vector<8x64xf32>
    %cst_69 = arith.constant 1.000000e+00 : f32
    %144 = vector.broadcast %cst_69 : f32 to vector<8x64xf32>
    %145 = arith.addf %144, %143 : vector<8x64xf32>
    %146 = arith.mulf %134, %145 : vector<8x64xf32>
    %c288 = arith.constant 288 : index
    %c0_70 = arith.constant 0 : index
    %147 = vector.load %arg3[%c288, %c0_70] : memref<432x128xf32, #tpu.memory_space<vmem>>, vector<64x32xf32>
    %cst_71 = arith.constant dense<0.000000e+00> : vector<8x32xf32>
    %148 = tpu.matmul %146, %147, %cst_71 {dimension_numbers = #tpu.dot_dimension_numbers<[1], [0], [0], [1], [0, 0, 1, 1], [], []>} : vector<8x64xf32>, vector<64x32xf32>, vector<8x32xf32> -> vector<8x32xf32>
    %c425 = arith.constant 425 : index
    %c0_72 = arith.constant 0 : index
    %149 = vector.load %arg3[%c425, %c0_72] : memref<432x128xf32, #tpu.memory_space<vmem>>, vector<1x32xf32>
    %150 = vector.broadcast %149 : vector<1x32xf32> to vector<8x32xf32>
    %151 = arith.addf %148, %150 : vector<8x32xf32>
    %152 = arith.addf %151, %127 : vector<8x32xf32>
    %cst_73 = arith.constant dense<0.000000e+00> : vector<8xf32>
    %153 = vector.multi_reduction <add>, %152, %cst_73 [1] : vector<8x32xf32> to vector<8xf32>
    %154 = vector.shape_cast %153 : vector<8xf32> to vector<8x1xf32>
    %cst_74 = arith.constant 3.200000e+01 : f32
    %155 = vector.broadcast %cst_74 : f32 to vector<8x1xf32>
    %156 = arith.divf %154, %155 : vector<8x1xf32>
    %157 = vector.broadcast %156 : vector<8x1xf32> to vector<8x32xf32>
    %158 = arith.subf %152, %157 : vector<8x32xf32>
    %159 = arith.mulf %158, %158 : vector<8x32xf32>
    %cst_75 = arith.constant dense<0.000000e+00> : vector<8xf32>
    %160 = vector.multi_reduction <add>, %159, %cst_75 [1] : vector<8x32xf32> to vector<8xf32>
    %161 = vector.shape_cast %160 : vector<8xf32> to vector<8x1xf32>
    %cst_76 = arith.constant 0.0322580636 : f32
    %162 = vector.broadcast %cst_76 : f32 to vector<8x1xf32>
    %163 = arith.mulf %161, %162 : vector<8x1xf32>
    %164 = math.sqrt %163 : vector<8x1xf32>
    %cst_77 = arith.constant 9.99999997E-7 : f32
    %165 = vector.broadcast %cst_77 : f32 to vector<8x1xf32>
    %166 = arith.addf %164, %165 : vector<8x1xf32>
    %167 = tpu.reciprocal %166 : vector<8x1xf32> -> vector<8x1xf32>
    %c430 = arith.constant 430 : index
    %c0_78 = arith.constant 0 : index
    %168 = vector.load %arg3[%c430, %c0_78] : memref<432x128xf32, #tpu.memory_space<vmem>>, vector<1x32xf32>
    %169 = vector.broadcast %167 : vector<8x1xf32> to vector<8x32xf32>
    %170 = arith.mulf %158, %169 : vector<8x32xf32>
    %171 = vector.broadcast %168 : vector<1x32xf32> to vector<8x32xf32>
    %172 = arith.mulf %171, %170 : vector<8x32xf32>
    %c431 = arith.constant 431 : index
    %c0_79 = arith.constant 0 : index
    %173 = vector.load %arg3[%c431, %c0_79] : memref<432x128xf32, #tpu.memory_space<vmem>>, vector<1x32xf32>
    %174 = vector.broadcast %173 : vector<1x32xf32> to vector<8x32xf32>
    %175 = arith.addf %172, %174 : vector<8x32xf32>
    %176 = vector.extract_strided_slice %175 {offsets = [0, 0], sizes = [1, 32], strides = [1, 1]} : vector<8x32xf32> to vector<1x32xf32>
    %177 = vector.extract_strided_slice %175 {offsets = [1, 0], sizes = [1, 32], strides = [1, 1]} : vector<8x32xf32> to vector<1x32xf32>
    %178 = vector.extract_strided_slice %175 {offsets = [2, 0], sizes = [1, 32], strides = [1, 1]} : vector<8x32xf32> to vector<1x32xf32>
    %179 = vector.extract_strided_slice %175 {offsets = [3, 0], sizes = [1, 32], strides = [1, 1]} : vector<8x32xf32> to vector<1x32xf32>
    %180 = tpu.concatenate %176, %177, %178, %179 in 1 : vector<1x32xf32>, vector<1x32xf32>, vector<1x32xf32>, vector<1x32xf32> -> vector<1x128xf32>
    %181 = vector.extract_strided_slice %175 {offsets = [4, 0], sizes = [1, 32], strides = [1, 1]} : vector<8x32xf32> to vector<1x32xf32>
    %182 = vector.extract_strided_slice %175 {offsets = [5, 0], sizes = [1, 32], strides = [1, 1]} : vector<8x32xf32> to vector<1x32xf32>
    %183 = vector.extract_strided_slice %175 {offsets = [6, 0], sizes = [1, 32], strides = [1, 1]} : vector<8x32xf32> to vector<1x32xf32>
    %184 = vector.extract_strided_slice %175 {offsets = [7, 0], sizes = [1, 32], strides = [1, 1]} : vector<8x32xf32> to vector<1x32xf32>
    %185 = tpu.concatenate %181, %182, %183, %184 in 1 : vector<1x32xf32>, vector<1x32xf32>, vector<1x32xf32>, vector<1x32xf32> -> vector<1x128xf32>
    %186 = tpu.concatenate %180, %185 in 0 : vector<1x128xf32>, vector<1x128xf32> -> vector<2x128xf32>
    %c0_80 = arith.constant 0 : index
    %c0_81 = arith.constant 0 : index
    %c0_82 = arith.constant 0 : index
    %187 = vector.load %arg4[%c0_80, %c0_81, %c0_82] : memref<1x2x128xf32, #tpu.memory_space<vmem>>, vector<1x2x128xf32>
    %188 = vector.shape_cast %187 : vector<1x2x128xf32> to vector<2x128xf32>
    %189 = vector.shape_cast %186 : vector<2x128xf32> to vector<1x2x128xf32>
    tpu.vector_store %arg4[%c0_80, %c0_81, %c0_82], %189 {strides = array<i32>} : memref<1x2x128xf32, #tpu.memory_space<vmem>>, vector<1x2x128xf32>,
    return
  }
  func.func @transform_0(%arg0: i32) -> (i32, i32, i32, i32) {
    %c0_i32 = arith.constant 0 : i32
    %c0_i32_0 = arith.constant 0 : i32
    %c0_i32_1 = arith.constant 0 : i32
    %c0_i32_2 = arith.constant 0 : i32
    return %c0_i32, %arg0, %c0_i32_0, %c0_i32_1 : i32, i32, i32, i32
  }
  func.func @transform_1(%arg0: i32) -> (i32, i32, i32, i32) {
    %c0_i32 = arith.constant 0 : i32
    %c0_i32_0 = arith.constant 0 : i32
    %c0_i32_1 = arith.constant 0 : i32
    %c0_i32_2 = arith.constant 0 : i32
    return %c0_i32, %arg0, %c0_i32_0, %c0_i32_1 : i32, i32, i32, i32
  }
  func.func @transform_2(%arg0: i32) -> (i32, i32) {
    %c0_i32 = arith.constant 0 : i32
    %c0_i32_0 = arith.constant 0 : i32
    %c0_i32_1 = arith.constant 0 : i32
    return %c0_i32, %c0_i32_0 : i32, i32
  }
  func.func @transform_3(%arg0: i32) -> (i32, i32, i32) {
    %c0_i32 = arith.constant 0 : i32
    %c0_i32_0 = arith.constant 0 : i32
    %c0_i32_1 = arith.constant 0 : i32
    return %arg0, %c0_i32, %c0_i32_0 : i32, i32, i32
  }
}

</mosaic_0001>

<llo_original>
// kernel: transformer_decoder_layer.1
$region0: #{transformer_decoder_layer.1}
  #allocation0 [shape = 'u32[]', space=smem, size = 0x4, offset = 0x4, fixed_abs, tag = 'smem constant byte address 0x4 - core index']
  #allocation1 [shape = 'u32[144,128]{1,0:T(1,128)}', space=vmem, size = 0x12000, scoped, tag = 'internal scratch']
  %s0 = inlined_call_operand.vmem [shape: f32[2,2,8,32], index: 0, kind: input, shape index: {}]
  %s1 = inlined_call_operand.vmem [shape: f32[2,2,8,32], index: 1, kind: input, shape index: {}]
  %s2 = inlined_call_operand.vmem [shape: f32[432,128], index: 2, kind: input, shape index: {}]
  %s3 = inlined_call_operand.vmem [shape: f32[2,2,128], index: 3, kind: output, shape index: {}]
  %s4 = sld [smem:[#allocation0]]
  $region121: #{transformer_decoder_layer.1} parent=0
    _
  %s6 = ssub.s32 1, %s4
  %s7 = scalar_select 0, %s6, %s4
  $region1: #{transformer_decoder_layer.1} parent=0
    #allocation2 [shape = 'u8[16384]{0}', space=vmem, size = 0x4000, scoped, tag = 'input window, operand 0']
    #allocation3 [shape = 'u8[16384]{0}', space=vmem, size = 0x4000, scoped, tag = 'input window, operand 1']
    loop: start=0, step=1, limit=4
    $region2: #{transformer_decoder_layer.1} parent=1 // loop_pre_header
      _
    $region3: #{transformer_decoder_layer.1} parent=1 // loop_header
      %s9 = sphi 0, %s13
      %p10 = scmp.ge.s32.totalorder %s9, 4
      %s19 = sphi 0, %s21
      %s22 = sphi 0, %s19
      %s23 = sphi 0, %s22
      %s39 = sphi 0, %s23
      %s45 = sphi 0, %s47
      %s48 = sphi 0, %s45
      %s49 = sphi 0, %s48
      %s65 = sphi 0, %s49
      %s69 = sphi 0, %s69
      %s71 = sphi 0, %s69
      %s72 = sphi 0, %s71
      %s86 = sphi 0, %s72
      %s92 = sphi 0, %s94
      %s95 = sphi 0, %s92
      %s96 = sphi 0, %s95
      %s112 = sphi 0, %s96
    $region4: #{transformer_decoder_layer.1} parent=1 // loop_header_branch
      %12 = sbr.rel (%p10) target = $region8
    $region5: #{transformer_decoder_layer.1} parent=1 // loop_body
      %s14 = ssub.s32 %s9, 1
      %s15 = ssub.s32 %s9, 2
      %s16 = sadd.s32 %s9, 1
      %s17 = ssub.s32 %s9, %s16
      %p18 = scmp.eq.s32.totalorder %s17, 0
      %s20 = sadd.s32 %s19, 1
      %s21 = scalar_select %p18, %s19, %s20
      %p24 = pneg %p18
      %p25 = scmp.eq.s32.totalorder %s9, 1
      %p26 = por %p24, %p25
      %p27 = scmp.ne.s32.totalorder %s19, %s22
      %p28 = scmp.eq.s32.totalorder %s9, 0
      %p29 = por %p27, %p28
      %p30 = scmp.ne.s32.totalorder %s19, %s22
      %p31 = scmp.eq.s32.totalorder %s14, 1
      %p32 = por %p30, %p31
      %p33 = scmp.ne.s32.totalorder %s22, %s23
      %p34 = scmp.eq.s32.totalorder %s14, 0
      %p35 = por %p33, %p34
      %p36 = scmp.ne.s32.totalorder %s22, %s23
      %p37 = scmp.eq.s32.totalorder %s15, 1
      %p38 = por %p36, %p37
      %p40 = scmp.ne.s32.totalorder %s23, %s39
      %p41 = scmp.eq.s32.totalorder %s15, 0
      %p42 = por %p40, %p41
      %s43 = ssub.s32 %s9, %s16
      %p44 = scmp.eq.s32.totalorder %s43, 0
      %s46 = sadd.s32 %s45, 1
      %s47 = scalar_select %p44, %s45, %s46
      %p50 = pneg %p44
      %p51 = scmp.eq.s32.totalorder %s9, 1
      %p52 = por %p50, %p51
      %p53 = scmp.ne.s32.totalorder %s45, %s48
      %p54 = scmp.eq.s32.totalorder %s9, 0
      %p55 = por %p53, %p54
      %p56 = scmp.ne.s32.totalorder %s45, %s48
      %p57 = scmp.eq.s32.totalorder %s14, 1
      %p58 = por %p56, %p57
      %p59 = scmp.ne.s32.totalorder %s48, %s49
      %p60 = scmp.eq.s32.totalorder %s14, 0
      %p61 = por %p59, %p60
      %p62 = scmp.ne.s32.totalorder %s48, %s49
      %p63 = scmp.eq.s32.totalorder %s15, 1
      %p64 = por %p62, %p63
      %p66 = scmp.ne.s32.totalorder %s49, %s65
      %p67 = scmp.eq.s32.totalorder %s15, 0
      %p68 = por %p66, %p67
      %s70 = sadd.s32 %s69, 1
      %p73 = scmp.eq.s32.totalorder %s9, 1
      %p74 = scmp.ne.s32.totalorder %s69, %s71
      %p75 = scmp.eq.s32.totalorder %s9, 0
      %p76 = por %p74, %p75
      %p77 = scmp.ne.s32.totalorder %s69, %s71
      %p78 = scmp.eq.s32.totalorder %s14, 1
      %p79 = por %p77, %p78
      %p80 = scmp.ne.s32.totalorder %s71, %s72
      %p81 = scmp.eq.s32.totalorder %s14, 0
      %p82 = por %p80, %p81
      %p83 = scmp.ne.s32.totalorder %s71, %s72
      %p84 = scmp.eq.s32.totalorder %s15, 1
      %p85 = por %p83, %p84
      %p87 = scmp.ne.s32.totalorder %s72, %s86
      %p88 = scmp.eq.s32.totalorder %s15, 0
      %p89 = por %p87, %p88
      %s90 = ssub.s32 %s9, %s16
      %p91 = scmp.eq.s32.totalorder %s90, 0
      %s93 = sadd.s32 %s92, 1
      %s94 = scalar_select %p91, %s92, %s93
      %p97 = pneg %p91
      %p98 = scmp.eq.s32.totalorder %s9, 1
      %p99 = por %p97, %p98
      %p100 = scmp.ne.s32.totalorder %s92, %s95
      %p101 = scmp.eq.s32.totalorder %s9, 0
      %p102 = por %p100, %p101
      %p103 = scmp.ne.s32.totalorder %s92, %s95
      %p104 = scmp.eq.s32.totalorder %s14, 1
      %p105 = por %p103, %p104
      %p106 = scmp.ne.s32.totalorder %s95, %s96
      %p107 = scmp.eq.s32.totalorder %s14, 0
      %p108 = por %p106, %p107
      %p109 = scmp.ne.s32.totalorder %s95, %s96
      %p110 = scmp.eq.s32.totalorder %s15, 1
      %p111 = por %p109, %p110
      %p113 = scmp.ne.s32.totalorder %s96, %s112
      %p114 = scmp.eq.s32.totalorder %s15, 0
      %p115 = por %p113, %p114
      %p116 = scmp.le.s32.totalorder 1, %s9
      %p117 = scmp.lt.s32.totalorder %s9, 3
      %p118 = pnand %p116, %p117
      %p119 = pneg %p118
      // Predicated region
      $region9: #{transformer_decoder_layer.1} parent=5 // pred_check
        _
      $region10: #{transformer_decoder_layer.1} parent=5 // pred_check_branch
        %121 = sbr.rel (%p118) target = $region12
      $region11: #{transformer_decoder_layer.1} parent=5 // pred_region
        %s122 = ssub.s32 %s9, 1
        // Predicated region
        $region13: #{transformer_decoder_layer.1} parent=11 // pred_check
          %p123 = pneg %p82
        $region14: #{transformer_decoder_layer.1} parent=11 // pred_check_branch
          %125 = sbr.rel (%p123) target = $region16
        $region15: #{transformer_decoder_layer.1} parent=11 // pred_region
          _
        $region16: #{transformer_decoder_layer.1} parent=11 // pred_fallthru
          _
      $region12: #{transformer_decoder_layer.1} parent=5 // pred_fallthru
        _
      %p126 = scmp.lt.s32.totalorder %s9, 2
      // Predicated region
      $region17: #{transformer_decoder_layer.1} parent=5 // pred_check
        %p127 = pneg %p126
      $region18: #{transformer_decoder_layer.1} parent=5 // pred_check_branch
        %129 = sbr.rel (%p127) target = $region20
      $region19: #{transformer_decoder_layer.1} parent=5 // pred_region
        // Predicated region
        $region21: #{transformer_decoder_layer.1} parent=19 // pred_check
          %p130 = pneg %p29
        $region22: #{transformer_decoder_layer.1} parent=19 // pred_check_branch
          %132 = sbr.rel (%p130) target = $region24
        $region23: #{transformer_decoder_layer.1} parent=19 // pred_region
          %s133 = sand.u32 %s19, 1
          %s134 = sand.u32 %s19, 1
          %s135 = smul.addr %s134, 16
          %s136 = scalar_lea.vmem [#allocation2], %s135
          %s137 = smul.addr %s9, 8
          %s138 = scalar_lea.vmem %s0, %s137
          // Predicated region
          $region25: #{transformer_decoder_layer.1} parent=23 // pred_check
            _
          $region26: #{transformer_decoder_layer.1} parent=23 // pred_check_branch
            %140 = sbr.rel (0) target = $region28
          $region27: #{transformer_decoder_layer.1} parent=23 // pred_region
            // Predicated region
            $region29: #{transformer_decoder_layer.1} parent=27 // pred_check
              _
            $region30: #{transformer_decoder_layer.1} parent=27 // pred_check_branch
              %142 = sbr.rel (0) target = $region32
            $region31: #{transformer_decoder_layer.1} parent=27 // pred_region
              // Predicated region
              $region44: #{transformer_decoder_layer.1} parent=31 // pred_check
                _
              $region45: #{transformer_decoder_layer.1} parent=31 // pred_check_branch
                %160 = sbr.rel (0) target = $region47
              $region46: #{transformer_decoder_layer.1} parent=31 // pred_region
                loop: start=0, step=1, limit=1
                $region48: #{transformer_decoder_layer.1} parent=46 // loop_pre_header
                  _
                $region49: #{transformer_decoder_layer.1} parent=46 // loop_header
                  %s162 = sphi 0, %s166
                  %p163 = scmp.ge.s32.totalorder %s162, 1
                  %s167 = sphi %s138, %s138
                  %s168 = sphi %s136, %s136
                $region50: #{transformer_decoder_layer.1} parent=46 // loop_header_branch
                  %165 = sbr.rel (%p163) target = $region54
                $region51: #{transformer_decoder_layer.1} parent=46 // loop_body
                  %v169 = vld [vmem:[%s167] sm:$0xff]
                  %170 = vst [vmem:[%s168] sm:$0xff] %v169
                  %v171 = vld [vmem:[%s167 + $0x10] sm:$0xff]
                  %172 = vst [vmem:[%s168 + $0x8] sm:$0xff] %v171
                $region52: #{transformer_decoder_layer.1} parent=46 // loop_footer
                  %s166 = sadd.s32 1, %s162
                $region53: #{transformer_decoder_layer.1} parent=46 // loop_footer_branch
                  %161 = sbr.rel target = $region49
                $region54: #{transformer_decoder_layer.1} parent=46 // loop_exit
                  _
              $region47: #{transformer_decoder_layer.1} parent=31 // pred_fallthru
                _
              // Predicated region
              $region55: #{transformer_decoder_layer.1} parent=31 // pred_check
                _
              $region56: #{transformer_decoder_layer.1} parent=31 // pred_check_branch
                %174 = sbr.rel target = $region58
              $region57: #{transformer_decoder_layer.1} parent=31 // pred_region
                _
              $region58: #{transformer_decoder_layer.1} parent=31 // pred_fallthru
                _
            $region32: #{transformer_decoder_layer.1} parent=27 // pred_fallthru
              _
            // Predicated region
            $region33: #{transformer_decoder_layer.1} parent=27 // pred_check
              _
            $region34: #{transformer_decoder_layer.1} parent=27 // pred_check_branch
              %144 = sbr.rel target = $region36
            $region35: #{transformer_decoder_layer.1} parent=27 // pred_region
              %s146 = ssub.s32 256, 1
              loop: start=0, step=1, limit=1
              $region37: #{transformer_decoder_layer.1} parent=35 // loop_pre_header
                _
              $region38: #{transformer_decoder_layer.1} parent=35 // loop_header
                %s148 = sphi 0, %s152
                %p149 = scmp.ge.s32.totalorder %s148, 1
                %s153 = sphi %s138, %s138
                %s154 = sphi %s136, %s136
              $region39: #{transformer_decoder_layer.1} parent=35 // loop_header_branch
                %151 = sbr.rel (%p149) target = $region43
              $region40: #{transformer_decoder_layer.1} parent=35 // loop_body
                %v155 = vld [vmem:[%s153] sm:%s146]
                %156 = vst [vmem:[%s154] sm:%s146] %v155
                %v157 = vld [vmem:[%s153 + $0x10] sm:%s146]
                %158 = vst [vmem:[%s154 + $0x8] sm:%s146] %v157
              $region41: #{transformer_decoder_layer.1} parent=35 // loop_footer
                %s152 = sadd.s32 1, %s148
              $region42: #{transformer_decoder_layer.1} parent=35 // loop_footer_branch
                %147 = sbr.rel target = $region38
              $region43: #{transformer_decoder_layer.1} parent=35 // loop_exit
                _
            $region36: #{transformer_decoder_layer.1} parent=27 // pred_fallthru
              _
          $region28: #{transformer_decoder_layer.1} parent=23 // pred_fallthru
            _
          %175 = vnop
        $region24: #{transformer_decoder_layer.1} parent=19 // pred_fallthru
          _
        // Predicated region
        $region59: #{transformer_decoder_layer.1} parent=19 // pred_check
          %p176 = pneg %p55
        $region60: #{transformer_decoder_layer.1} parent=19 // pred_check_branch
          %178 = sbr.rel (%p176) target = $region62
        $region61: #{transformer_decoder_layer.1} parent=19 // pred_region
          %s179 = sand.u32 %s45, 1
          %s180 = sand.u32 %s45, 1
          %s181 = smul.addr %s180, 16
          %s182 = scalar_lea.vmem [#allocation3], %s181
          %s183 = smul.addr %s9, 8
          %s184 = scalar_lea.vmem %s1, %s183
          // Predicated region
          $region63: #{transformer_decoder_layer.1} parent=61 // pred_check
            _
          $region64: #{transformer_decoder_layer.1} parent=61 // pred_check_branch
            %186 = sbr.rel (0) target = $region66
          $region65: #{transformer_decoder_layer.1} parent=61 // pred_region
            // Predicated region
            $region67: #{transformer_decoder_layer.1} parent=65 // pred_check
              _
            $region68: #{transformer_decoder_layer.1} parent=65 // pred_check_branch
              %188 = sbr.rel (0) target = $region70
            $region69: #{transformer_decoder_layer.1} parent=65 // pred_region
              // Predicated region
              $region82: #{transformer_decoder_layer.1} parent=69 // pred_check
                _
              $region83: #{transformer_decoder_layer.1} parent=69 // pred_check_branch
                %206 = sbr.rel (0) target = $region85
              $region84: #{transformer_decoder_layer.1} parent=69 // pred_region
                loop: start=0, step=1, limit=1
                $region86: #{transformer_decoder_layer.1} parent=84 // loop_pre_header
                  _
                $region87: #{transformer_decoder_layer.1} parent=84 // loop_header
                  %s208 = sphi 0, %s212
                  %p209 = scmp.ge.s32.totalorder %s208, 1
                  %s213 = sphi %s184, %s184
                  %s214 = sphi %s182, %s182
                $region88: #{transformer_decoder_layer.1} parent=84 // loop_header_branch
                  %211 = sbr.rel (%p209) target = $region92
                $region89: #{transformer_decoder_layer.1} parent=84 // loop_body
                  %v215 = vld [vmem:[%s213] sm:$0xff]
                  %216 = vst [vmem:[%s214] sm:$0xff] %v215
                  %v217 = vld [vmem:[%s213 + $0x10] sm:$0xff]
                  %218 = vst [vmem:[%s214 + $0x8] sm:$0xff] %v217
                $region90: #{transformer_decoder_layer.1} parent=84 // loop_footer
                  %s212 = sadd.s32 1, %s208
                $region91: #{transformer_decoder_layer.1} parent=84 // loop_footer_branch
                  %207 = sbr.rel target = $region87
                $region92: #{transformer_decoder_layer.1} parent=84 // loop_exit
                  _
              $region85: #{transformer_decoder_layer.1} parent=69 // pred_fallthru
                _
              // Predicated region
              $region93: #{transformer_decoder_layer.1} parent=69 // pred_check
                _
              $region94: #{transformer_decoder_layer.1} parent=69 // pred_check_branch
                %220 = sbr.rel target = $region96
              $region95: #{transformer_decoder_layer.1} parent=69 // pred_region
                _
              $region96: #{transformer_decoder_layer.1} parent=69 // pred_fallthru
                _
            $region70: #{transformer_decoder_layer.1} parent=65 // pred_fallthru
              _
            // Predicated region
            $region71: #{transformer_decoder_layer.1} parent=65 // pred_check
              _
            $region72: #{transformer_decoder_layer.1} parent=65 // pred_check_branch
              %190 = sbr.rel target = $region74
            $region73: #{transformer_decoder_layer.1} parent=65 // pred_region
              %s192 = ssub.s32 256, 1
              loop: start=0, step=1, limit=1
              $region75: #{transformer_decoder_layer.1} parent=73 // loop_pre_header
                _
              $region76: #{transformer_decoder_layer.1} parent=73 // loop_header
                %s194 = sphi 0, %s198
                %p195 = scmp.ge.s32.totalorder %s194, 1
                %s199 = sphi %s184, %s184
                %s200 = sphi %s182, %s182
              $region77: #{transformer_decoder_layer.1} parent=73 // loop_header_branch
                %197 = sbr.rel (%p195) target = $region81
              $region78: #{transformer_decoder_layer.1} parent=73 // loop_body
                %v201 = vld [vmem:[%s199] sm:%s192]
                %202 = vst [vmem:[%s200] sm:%s192] %v201
                %v203 = vld [vmem:[%s199 + $0x10] sm:%s192]
                %204 = vst [vmem:[%s200 + $0x8] sm:%s192] %v203
              $region79: #{transformer_decoder_layer.1} parent=73 // loop_footer
                %s198 = sadd.s32 1, %s194
              $region80: #{transformer_decoder_layer.1} parent=73 // loop_footer_branch
                %193 = sbr.rel target = $region76
              $region81: #{transformer_decoder_layer.1} parent=73 // loop_exit
                _
            $region74: #{transformer_decoder_layer.1} parent=65 // pred_fallthru
              _
          $region66: #{transformer_decoder_layer.1} parent=61 // pred_fallthru
            _
          %221 = vnop
        $region62: #{transformer_decoder_layer.1} parent=19 // pred_fallthru
          _
      $region20: #{transformer_decoder_layer.1} parent=5 // pred_fallthru
        _
      %p222 = scmp.le.s32.totalorder 1, %s9
      %p223 = scmp.lt.s32.totalorder %s9, 3
      %p224 = pnand %p222, %p223
      %p225 = pneg %p224
      // Predicated region
      $region97: #{transformer_decoder_layer.1} parent=5 // pred_check
        _
      $region98: #{transformer_decoder_layer.1} parent=5 // pred_check_branch
        %227 = sbr.rel (%p224) target = $region100
      $region99: #{transformer_decoder_layer.1} parent=5 // pred_region
        %s228 = ssub.s32 %s9, 1
        %s229 = sand.u32 %s22, 1
        %s230 = sand.u32 %s22, 1
        %s231 = smul.addr %s230, 16
        %s232 = scalar_lea.vmem [#allocation2], %s231
        // Predicated region
        $region101: #{transformer_decoder_layer.1} parent=99 // pred_check
          %p233 = pneg %p35
        $region102: #{transformer_decoder_layer.1} parent=99 // pred_check_branch
          %235 = sbr.rel (%p233) target = $region104
        $region103: #{transformer_decoder_layer.1} parent=99 // pred_region
          _
        $region104: #{transformer_decoder_layer.1} parent=99 // pred_fallthru
          _
        %s236 = sand.u32 %s48, 1
        %s237 = sand.u32 %s48, 1
        %s238 = smul.addr %s237, 16
        %s239 = scalar_lea.vmem [#allocation3], %s238
        // Predicated region
        $region105: #{transformer_decoder_layer.1} parent=99 // pred_check
          %p240 = pneg %p61
        $region106: #{transformer_decoder_layer.1} parent=99 // pred_check_branch
          %242 = sbr.rel (%p240) target = $region108
        $region107: #{transformer_decoder_layer.1} parent=99 // pred_region
          _
        $region108: #{transformer_decoder_layer.1} parent=99 // pred_fallthru
          _
        %s243 = sand.u32 %s22, 1
        %s244 = sand.u32 %s22, 1
        %s245 = smul.addr %s244, 16
        %s246 = scalar_lea.vmem [#allocation2], %s245
        %p247 = pneg %p35
        %p248 = pneg %p32
        %s249 = sand.u32 %s48, 1
        %s250 = sand.u32 %s48, 1
        %s251 = smul.addr %s250, 16
        %s252 = scalar_lea.vmem [#allocation3], %s251
        %p253 = pneg %p61
        %p254 = pneg %p58
        %p255 = pneg %p82
        %p256 = pneg %p79
        %p257 = pneg %p108
        %p258 = pneg %p105
        %p259 = scmp.lt.s32.totalorder %s14, 1
        %s260 = scalar_select %p259, %s14, 1
        %s261 = smul.addr %s260, 2
        %s262 = scalar_lea.vmem %s3, %s261
        %p263 = scmp.lt.s32.totalorder %s14, 1
        %s264 = scalar_select %p263, %s14, 1
        %s265 = smul.addr %s264, 2
        %s266 = scalar_lea.vmem %s3, %s265
        %v267 = vld [vmem:[%s232] sm:$0xff]
        %s268 = scalar_lea.vmem %s232, 8 [#allocation2]
        %v269 = vld [vmem:[%s268] sm:$0xff]
        %v270 = vld [vmem:[%s2 + $0x160] sm:$0xff]
        %v271 = vld [vmem:[%s2 + $0x168] sm:$0xff]
        %v272 = vld [vmem:[%s2 + $0x170] sm:$0xff]
        %v273 = vld [vmem:[%s2 + $0x178] sm:$0xff]
        %v274 = vld [vmem:[%s2 + $0x180] sm:$0xff]
        %v275 = vld [vmem:[%s2 + $0x188] sm:$0xff]
        %v276 = vld [vmem:[%s2 + $0x190] sm:$0xff]
        %v277 = vld [vmem:[%s2 + $0x198] sm:$0xff]
        %v278 = vld [vmem:[%s239] sm:$0xff]
        %v279 = vld [vmem:[%s2] sm:$0xff]
        %v280 = vld [vmem:[%s2 + $0x8] sm:$0xff]
        %v281 = vld [vmem:[%s2 + $0x10] sm:$0xff]
        %v282 = vld [vmem:[%s2 + $0x18] sm:$0xff]
        %v283 = vld [vmem:[%s2 + $0x1a0] sm:$0x1]
        %v284 = vlaneseq
        %v285 = vshrl.u32 %v284, 7
        %v286 = vsub.s32 0, %v285
        %v287 = vrot.slane %v283, %v286
        %vm288 = vcmask 261120
        %v290 = vsel %vm288, %v267, 0
        %292 = vmatprep.subr.mxu0 0.0
        %293 = vmatpush1.msra.mxu0 0.0
        %294 = vmatprep.subr.mxu0 0.0
        %295 = vmatpush1.msra.mxu0 0.0
        %296 = vmatprep.subr.mxu0 0.0
        %297 = vmatpush1.msra.mxu0 0.0
        %298 = vmatprep.subr.mxu0 0.0
        %299 = vmatpush1.msra.mxu0 0.0
        %300 = vmatprep.subr.mxu0 0.0
        %301 = vmatpush1.msra.mxu0 0.0
        %302 = vmatprep.subr.mxu0 0.0
        %303 = vmatpush1.msra.mxu0 0.0
        %304 = vmatprep.subr.mxu0 0.0
        %305 = vmatpush1.msra.mxu0 0.0
        %306 = vmatprep.subr.mxu0 0.0
        %307 = vmatpush1.msra.mxu0 0.0
        %308 = vmatprep.subr.mxu0 0.0
        %309 = vmatpush1.msra.mxu0 0.0
        %310 = vmatprep.subr.mxu0 0.0
        %311 = vmatpush1.msra.mxu0 0.0
        %312 = vmatprep.subr.mxu0 0.0
        %313 = vmatpush1.msra.mxu0 0.0
        %314 = vmatprep.subr.mxu0 0.0
        %315 = vmatpush1.msra.mxu0 0.0
        %316 = vmatprep.subr.mxu0 0.0
        %317 = vmatpush1.msra.mxu0 %v282
        %318 = vmatprep.subr.mxu0 0.0
        %319 = vmatpush1.msra.mxu0 %v281
        %320 = vmatprep.subr.mxu0 0.0
        %321 = vmatpush1.msra.mxu0 %v280
        %322 = vmatprep.subr.mxu0 0.0
        %323 = vmatpush1.msra.mxu0 %v279
        %324 = vmatprep.subr.mxu0 0.0
        %325 = vmatpush2.msra.mxu0 0.0
        %326 = vmatprep.subr.mxu0 0.0
        %327 = vmatpush2.msra.mxu0 0.0
        %328 = vmatprep.subr.mxu0 0.0
        %329 = vmatpush2.msra.mxu0 0.0
        %330 = vmatprep.subr.mxu0 0.0
        %331 = vmatpush2.msra.mxu0 0.0
        %332 = vmatprep.subr.mxu0 0.0
        %333 = vmatpush2.msra.mxu0 0.0
        %334 = vmatprep.subr.mxu0 0.0
        %335 = vmatpush2.msra.mxu0 0.0
        %336 = vmatprep.subr.mxu0 0.0
        %337 = vmatpush2.msra.mxu0 0.0
        %338 = vmatprep.subr.mxu0 0.0
        %339 = vmatpush2.msra.mxu0 0.0
        %340 = vmatprep.subr.mxu0 0.0
        %341 = vmatpush2.msra.mxu0 0.0
        %342 = vmatprep.subr.mxu0 0.0
        %343 = vmatpush2.msra.mxu0 0.0
        %344 = vmatprep.subr.mxu0 0.0
        %345 = vmatpush2.msra.mxu0 0.0
        %346 = vmatprep.subr.mxu0 0.0
        %347 = vmatpush2.msra.mxu0 0.0
        %348 = vmatprep.subr.mxu0 0.0
        %349 = vmatpush2.msra.mxu0 0.0
        %350 = vmatprep.subr.mxu0 0.0
        %351 = vmatpush2.msra.mxu0 0.0
        %352 = vmatprep.subr.mxu0 0.0
        %353 = vmatpush2.msra.mxu0 0.0
        %354 = vmatprep.subr.mxu0 0.0
        %355 = vmatpush2.msra.mxu0 0.0
        %356 = vmatprep.mubr.f32.mxu0 0.0
        %357 = vmatmul.mubr.f32.gmra.mxu0 %v290
        %v358 = vpop.f32.mrf.mxu0
        %v359 = vadd.f32 %v287, %v358
        %v360 = vpop.f32.mrf.mxu0
        %361 = vdwg.mxu0
        %v362 = vld [vmem:[%s2 + $0x20] sm:$0xff]
        %v363 = vld [vmem:[%s2 + $0x28] sm:$0xff]
        %v364 = vld [vmem:[%s2 + $0x30] sm:$0xff]
        %v365 = vld [vmem:[%s2 + $0x38] sm:$0xff]
        %v366 = vld [vmem:[%s2 + $0x1a1] sm:$0x1]
        %v367 = vlaneseq
        %v368 = vshrl.u32 %v367, 7
        %v369 = vsub.s32 0, %v368
        %v370 = vrot.slane %v366, %v369
        %371 = vmatprep.subr.mxu0 0.0
        %372 = vmatpush1.msra.mxu0 0.0
        %373 = vmatprep.subr.mxu0 0.0
        %374 = vmatpush1.msra.mxu0 0.0
        %375 = vmatprep.subr.mxu0 0.0
        %376 = vmatpush1.msra.mxu0 0.0
        %377 = vmatprep.subr.mxu0 0.0
        %378 = vmatpush1.msra.mxu0 0.0
        %379 = vmatprep.subr.mxu0 0.0
        %380 = vmatpush1.msra.mxu0 0.0
        %381 = vmatprep.subr.mxu0 0.0
        %382 = vmatpush1.msra.mxu0 0.0
        %383 = vmatprep.subr.mxu0 0.0
        %384 = vmatpush1.msra.mxu0 0.0
        %385 = vmatprep.subr.mxu0 0.0
        %386 = vmatpush1.msra.mxu0 0.0
        %387 = vmatprep.subr.mxu0 0.0
        %388 = vmatpush1.msra.mxu0 0.0
        %389 = vmatprep.subr.mxu0 0.0
        %390 = vmatpush1.msra.mxu0 0.0
        %391 = vmatprep.subr.mxu0 0.0
        %392 = vmatpush1.msra.mxu0 0.0
        %393 = vmatprep.subr.mxu0 0.0
        %394 = vmatpush1.msra.mxu0 0.0
        %395 = vmatprep.subr.mxu0 0.0
        %396 = vmatpush1.msra.mxu0 %v365
        %397 = vmatprep.subr.mxu0 0.0
        %398 = vmatpush1.msra.mxu0 %v364
        %399 = vmatprep.subr.mxu0 0.0
        %400 = vmatpush1.msra.mxu0 %v363
        %401 = vmatprep.subr.mxu0 0.0
        %402 = vmatpush1.msra.mxu0 %v362
        %403 = vmatprep.subr.mxu0 0.0
        %404 = vmatpush2.msra.mxu0 0.0
        %405 = vmatprep.subr.mxu0 0.0
        %406 = vmatpush2.msra.mxu0 0.0
        %407 = vmatprep.subr.mxu0 0.0
        %408 = vmatpush2.msra.mxu0 0.0
        %409 = vmatprep.subr.mxu0 0.0
        %410 = vmatpush2.msra.mxu0 0.0
        %411 = vmatprep.subr.mxu0 0.0
        %412 = vmatpush2.msra.mxu0 0.0
        %413 = vmatprep.subr.mxu0 0.0
        %414 = vmatpush2.msra.mxu0 0.0
        %415 = vmatprep.subr.mxu0 0.0
        %416 = vmatpush2.msra.mxu0 0.0
        %417 = vmatprep.subr.mxu0 0.0
        %418 = vmatpush2.msra.mxu0 0.0
        %419 = vmatprep.subr.mxu0 0.0
        %420 = vmatpush2.msra.mxu0 0.0
        %421 = vmatprep.subr.mxu0 0.0
        %422 = vmatpush2.msra.mxu0 0.0
        %423 = vmatprep.subr.mxu0 0.0
        %424 = vmatpush2.msra.mxu0 0.0
        %425 = vmatprep.subr.mxu0 0.0
        %426 = vmatpush2.msra.mxu0 0.0
        %427 = vmatprep.subr.mxu0 0.0
        %428 = vmatpush2.msra.mxu0 0.0
        %429 = vmatprep.subr.mxu0 0.0
        %430 = vmatpush2.msra.mxu0 0.0
        %431 = vmatprep.subr.mxu0 0.0
        %432 = vmatpush2.msra.mxu0 0.0
        %433 = vmatprep.subr.mxu0 0.0
        %434 = vmatpush2.msra.mxu0 0.0
        %435 = vmatprep.mubr.f32.mxu0 0.0
        %436 = vmatmul.mubr.f32.gmra.mxu0 %v290
        %v437 = vpop.f32.mrf.mxu0
        %v438 = vadd.f32 %v370, %v437
        %v439 = vpop.f32.mrf.mxu0
        %440 = vdwg.mxu0
        %v441 = vld [vmem:[%s2 + $0x40] sm:$0xff]
        %v442 = vld [vmem:[%s2 + $0x48] sm:$0xff]
        %v443 = vld [vmem:[%s2 + $0x50] sm:$0xff]
        %v444 = vld [vmem:[%s2 + $0x58] sm:$0xff]
        %v445 = vld [vmem:[%s2 + $0x1a2] sm:$0x1]
        %v446 = vlaneseq
        %v447 = vshrl.u32 %v446, 7
        %v448 = vsub.s32 0, %v447
        %v449 = vrot.slane %v445, %v448
        %450 = vmatprep.subr.mxu0 0.0
        %451 = vmatpush1.msra.mxu0 0.0
        %452 = vmatprep.subr.mxu0 0.0
        %453 = vmatpush1.msra.mxu0 0.0
        %454 = vmatprep.subr.mxu0 0.0
        %455 = vmatpush1.msra.mxu0 0.0
        %456 = vmatprep.subr.mxu0 0.0
        %457 = vmatpush1.msra.mxu0 0.0
        %458 = vmatprep.subr.mxu0 0.0
        %459 = vmatpush1.msra.mxu0 0.0
        %460 = vmatprep.subr.mxu0 0.0
        %461 = vmatpush1.msra.mxu0 0.0
        %462 = vmatprep.subr.mxu0 0.0
        %463 = vmatpush1.msra.mxu0 0.0
        %464 = vmatprep.subr.mxu0 0.0
        %465 = vmatpush1.msra.mxu0 0.0
        %466 = vmatprep.subr.mxu0 0.0
        %467 = vmatpush1.msra.mxu0 0.0
        %468 = vmatprep.subr.mxu0 0.0
        %469 = vmatpush1.msra.mxu0 0.0
        %470 = vmatprep.subr.mxu0 0.0
        %471 = vmatpush1.msra.mxu0 0.0
        %472 = vmatprep.subr.mxu0 0.0
        %473 = vmatpush1.msra.mxu0 0.0
        %474 = vmatprep.subr.mxu0 0.0
        %475 = vmatpush1.msra.mxu0 %v444
        %476 = vmatprep.subr.mxu0 0.0
        %477 = vmatpush1.msra.mxu0 %v443
        %478 = vmatprep.subr.mxu0 0.0
        %479 = vmatpush1.msra.mxu0 %v442
        %480 = vmatprep.subr.mxu0 0.0
        %481 = vmatpush1.msra.mxu0 %v441
        %482 = vmatprep.subr.mxu0 0.0
        %483 = vmatpush2.msra.mxu0 0.0
        %484 = vmatprep.subr.mxu0 0.0
        %485 = vmatpush2.msra.mxu0 0.0
        %486 = vmatprep.subr.mxu0 0.0
        %487 = vmatpush2.msra.mxu0 0.0
        %488 = vmatprep.subr.mxu0 0.0
        %489 = vmatpush2.msra.mxu0 0.0
        %490 = vmatprep.subr.mxu0 0.0
        %491 = vmatpush2.msra.mxu0 0.0
        %492 = vmatprep.subr.mxu0 0.0
        %493 = vmatpush2.msra.mxu0 0.0
        %494 = vmatprep.subr.mxu0 0.0
        %495 = vmatpush2.msra.mxu0 0.0
        %496 = vmatprep.subr.mxu0 0.0
        %497 = vmatpush2.msra.mxu0 0.0
        %498 = vmatprep.subr.mxu0 0.0
        %499 = vmatpush2.msra.mxu0 0.0
        %500 = vmatprep.subr.mxu0 0.0
        %501 = vmatpush2.msra.mxu0 0.0
        %502 = vmatprep.subr.mxu0 0.0
        %503 = vmatpush2.msra.mxu0 0.0
        %504 = vmatprep.subr.mxu0 0.0
        %505 = vmatpush2.msra.mxu0 0.0
        %506 = vmatprep.subr.mxu0 0.0
        %507 = vmatpush2.msra.mxu0 0.0
        %508 = vmatprep.subr.mxu0 0.0
        %509 = vmatpush2.msra.mxu0 0.0
        %510 = vmatprep.subr.mxu0 0.0
        %511 = vmatpush2.msra.mxu0 0.0
        %512 = vmatprep.subr.mxu0 0.0
        %513 = vmatpush2.msra.mxu0 0.0
        %514 = vmatprep.mubr.f32.mxu0 0.0
        %515 = vmatmul.mubr.f32.gmra.mxu0 %v290
        %v516 = vpop.f32.mrf.mxu0
        %v517 = vadd.f32 %v449, %v516
        %v518 = vpop.f32.mrf.mxu0
        %519 = vdwg.mxu0
        %v520 = vmul.f32 %v438, %v270
        %v521 = vmul.f32 %v438, %v271
        %v522 = vmul.f32 %v438, %v272
        %v523 = vmul.f32 %v438, %v273
        %v524 = vmul.f32 %v517, %v270
        %v525 = vmul.f32 %v517, %v271
        %v526 = vmul.f32 %v517, %v272
        %v527 = vmul.f32 %v517, %v273
        %v529 = vsel %vm288, %v359, 0
        %v532 = vsel %vm288, %v520, 0
        %v535 = vsel %vm288, %v521, 0
        %v538 = vsel %vm288, %v522, 0
        %v541 = vsel %vm288, %v523, 0
        %543 = vmatprep.subr.mxu0 0.0
        %544 = vmatpush1.xpose.msra.mxu0 0.0
        %545 = vmatprep.subr.mxu0 0.0
        %546 = vmatpush1.xpose.msra.mxu0 0.0
        %547 = vmatprep.subr.mxu0 0.0
        %548 = vmatpush1.xpose.msra.mxu0 0.0
        %549 = vmatprep.subr.mxu0 0.0
        %550 = vmatpush1.xpose.msra.mxu0 0.0
        %551 = vmatprep.subr.mxu0 0.0
        %552 = vmatpush1.xpose.msra.mxu0 0.0
        %553 = vmatprep.subr.mxu0 0.0
        %554 = vmatpush1.xpose.msra.mxu0 0.0
        %555 = vmatprep.subr.mxu0 0.0
        %556 = vmatpush1.xpose.msra.mxu0 0.0
        %557 = vmatprep.subr.mxu0 0.0
        %558 = vmatpush1.xpose.msra.mxu0 0.0
        %559 = vmatprep.subr.mxu0 0.0
        %560 = vmatpush1.xpose.msra.mxu0 0.0
        %561 = vmatprep.subr.mxu0 0.0
        %562 = vmatpush1.xpose.msra.mxu0 0.0
        %563 = vmatprep.subr.mxu0 0.0
        %564 = vmatpush1.xpose.msra.mxu0 0.0
        %565 = vmatprep.subr.mxu0 0.0
        %566 = vmatpush1.xpose.msra.mxu0 0.0
        %567 = vmatprep.subr.mxu0 0.0
        %568 = vmatpush1.xpose.msra.mxu0 %v541
        %569 = vmatprep.subr.mxu0 0.0
        %570 = vmatpush1.xpose.msra.mxu0 %v538
        %571 = vmatprep.subr.mxu0 0.0
        %572 = vmatpush1.xpose.msra.mxu0 %v535
        %573 = vmatprep.subr.mxu0 0.0
        %574 = vmatpush1.xpose.msra.mxu0 %v532
        %575 = vmatprep.subr.mxu0 0.0
        %576 = vmatpush2.xpose.msra.mxu0 0.0
        %577 = vmatprep.subr.mxu0 0.0
        %578 = vmatpush2.xpose.msra.mxu0 0.0
        %579 = vmatprep.subr.mxu0 0.0
        %580 = vmatpush2.xpose.msra.mxu0 0.0
        %581 = vmatprep.subr.mxu0 0.0
        %582 = vmatpush2.xpose.msra.mxu0 0.0
        %583 = vmatprep.subr.mxu0 0.0
        %584 = vmatpush2.xpose.msra.mxu0 0.0
        %585 = vmatprep.subr.mxu0 0.0
        %586 = vmatpush2.xpose.msra.mxu0 0.0
        %587 = vmatprep.subr.mxu0 0.0
        %588 = vmatpush2.xpose.msra.mxu0 0.0
        %589 = vmatprep.subr.mxu0 0.0
        %590 = vmatpush2.xpose.msra.mxu0 0.0
        %591 = vmatprep.subr.mxu0 0.0
        %592 = vmatpush2.xpose.msra.mxu0 0.0
        %593 = vmatprep.subr.mxu0 0.0
        %594 = vmatpush2.xpose.msra.mxu0 0.0
        %595 = vmatprep.subr.mxu0 0.0
        %596 = vmatpush2.xpose.msra.mxu0 0.0
        %597 = vmatprep.subr.mxu0 0.0
        %598 = vmatpush2.xpose.msra.mxu0 0.0
        %599 = vmatprep.subr.mxu0 0.0
        %600 = vmatpush2.xpose.msra.mxu0 0.0
        %601 = vmatprep.subr.mxu0 0.0
        %602 = vmatpush2.xpose.msra.mxu0 0.0
        %603 = vmatprep.subr.mxu0 0.0
        %604 = vmatpush2.xpose.msra.mxu0 0.0
        %605 = vmatprep.subr.mxu0 0.0
        %606 = vmatpush2.xpose.msra.mxu0 0.0
        %607 = vmatprep.mubr.f32.mxu0 0.0
        %608 = vmatmul.mubr.f32.gmra.mxu0 %v529
        %v609 = vpop.f32.mrf.mxu0
        %v610 = vadd.f32 %v278, %v609
        %v611 = vpop.f32.mrf.mxu0
        %612 = vdwg.mxu0
        %v613 = vsel %vm288, %v610, -inf
        %614 = vmax.xlane.f32.xlu0 %v613
        %v615 = vpop.xlane.xlu0 %614
        %v616 = vsub.f32 %v610, %v615
        %v617 = vmul.f32 %v616, 1.442695
        %v618 = vpow.pop %v617
        %v620 = vsel %vm288, %v618, 0
        %622 = vmatprep.subr.mxu0 0.0
        %623 = vmatpush1.msra.mxu0 0.0
        %624 = vmatprep.subr.mxu0 0.0
        %625 = vmatpush1.msra.mxu0 0.0
        %626 = vmatprep.subr.mxu0 0.0
        %627 = vmatpush1.msra.mxu0 0.0
        %628 = vmatprep.subr.mxu0 0.0
        %629 = vmatpush1.msra.mxu0 0.0
        %630 = vmatprep.subr.mxu0 0.0
        %631 = vmatpush1.msra.mxu0 0.0
        %632 = vmatprep.subr.mxu0 0.0
        %633 = vmatpush1.msra.mxu0 0.0
        %634 = vmatprep.subr.mxu0 0.0
        %635 = vmatpush1.msra.mxu0 0.0
        %636 = vmatprep.subr.mxu0 0.0
        %637 = vmatpush1.msra.mxu0 0.0
        %638 = vmatprep.subr.mxu0 0.0
        %639 = vmatpush1.msra.mxu0 0.0
        %640 = vmatprep.subr.mxu0 0.0
        %641 = vmatpush1.msra.mxu0 0.0
        %642 = vmatprep.subr.mxu0 0.0
        %643 = vmatpush1.msra.mxu0 0.0
        %644 = vmatprep.subr.mxu0 0.0
        %645 = vmatpush1.msra.mxu0 0.0
        %646 = vmatprep.subr.mxu0 0.0
        %647 = vmatpush1.msra.mxu0 %v277
        %648 = vmatprep.subr.mxu0 0.0
        %649 = vmatpush1.msra.mxu0 %v276
        %650 = vmatprep.subr.mxu0 0.0
        %651 = vmatpush1.msra.mxu0 %v275
        %652 = vmatprep.subr.mxu0 0.0
        %653 = vmatpush1.msra.mxu0 %v274
        %654 = vmatprep.subr.mxu0 0.0
        %655 = vmatpush2.msra.mxu0 0.0
        %656 = vmatprep.subr.mxu0 0.0
        %657 = vmatpush2.msra.mxu0 0.0
        %658 = vmatprep.subr.mxu0 0.0
        %659 = vmatpush2.msra.mxu0 0.0
        %660 = vmatprep.subr.mxu0 0.0
        %661 = vmatpush2.msra.mxu0 0.0
        %662 = vmatprep.subr.mxu0 0.0
        %663 = vmatpush2.msra.mxu0 0.0
        %664 = vmatprep.subr.mxu0 0.0
        %665 = vmatpush2.msra.mxu0 0.0
        %666 = vmatprep.subr.mxu0 0.0
        %667 = vmatpush2.msra.mxu0 0.0
        %668 = vmatprep.subr.mxu0 0.0
        %669 = vmatpush2.msra.mxu0 0.0
        %670 = vmatprep.subr.mxu0 0.0
        %671 = vmatpush2.msra.mxu0 0.0
        %672 = vmatprep.subr.mxu0 0.0
        %673 = vmatpush2.msra.mxu0 0.0
        %674 = vmatprep.subr.mxu0 0.0
        %675 = vmatpush2.msra.mxu0 0.0
        %676 = vmatprep.subr.mxu0 0.0
        %677 = vmatpush2.msra.mxu0 0.0
        %678 = vmatprep.subr.mxu0 0.0
        %679 = vmatpush2.msra.mxu0 0.0
        %680 = vmatprep.subr.mxu0 0.0
        %681 = vmatpush2.msra.mxu0 0.0
        %682 = vmatprep.subr.mxu0 0.0
        %683 = vmatpush2.msra.mxu0 0.0
        %684 = vmatprep.subr.mxu0 0.0
        %685 = vmatpush2.msra.mxu0 0.0
        %686 = vmatprep.mubr.f32.mxu0 0.0
        %687 = vmatmul.mubr.f32.gmra.mxu0 %v620
        %v688 = vpop.f32.mrf.mxu0
        %v689 = vadd.f32 0.0, %v688
        %v690 = vpop.f32.mrf.mxu0
        %691 = vdwg.mxu0
        %v692 = vrcp.pop %v689
        %v693 = vmul.f32 %v618, %v692
        %v695 = vsel %vm288, %v693, 0
        %697 = vmatprep.subr.mxu0 0.0
        %698 = vmatpush1.msra.mxu0 0.0
        %699 = vmatprep.subr.mxu0 0.0
        %700 = vmatpush1.msra.mxu0 0.0
        %701 = vmatprep.subr.mxu0 0.0
        %702 = vmatpush1.msra.mxu0 0.0
        %703 = vmatprep.subr.mxu0 0.0
        %704 = vmatpush1.msra.mxu0 0.0
        %705 = vmatprep.subr.mxu0 0.0
        %706 = vmatpush1.msra.mxu0 0.0
        %707 = vmatprep.subr.mxu0 0.0
        %708 = vmatpush1.msra.mxu0 0.0
        %709 = vmatprep.subr.mxu0 0.0
        %710 = vmatpush1.msra.mxu0 0.0
        %711 = vmatprep.subr.mxu0 0.0
        %712 = vmatpush1.msra.mxu0 0.0
        %713 = vmatprep.subr.mxu0 0.0
        %714 = vmatpush1.msra.mxu0 0.0
        %715 = vmatprep.subr.mxu0 0.0
        %716 = vmatpush1.msra.mxu0 0.0
        %717 = vmatprep.subr.mxu0 0.0
        %718 = vmatpush1.msra.mxu0 0.0
        %719 = vmatprep.subr.mxu0 0.0
        %720 = vmatpush1.msra.mxu0 0.0
        %721 = vmatprep.subr.mxu0 0.0
        %722 = vmatpush1.msra.mxu0 %v527
        %723 = vmatprep.subr.mxu0 0.0
        %724 = vmatpush1.msra.mxu0 %v526
        %725 = vmatprep.subr.mxu0 0.0
        %726 = vmatpush1.msra.mxu0 %v525
        %727 = vmatprep.subr.mxu0 0.0
        %728 = vmatpush1.msra.mxu0 %v524
        %729 = vmatprep.subr.mxu0 0.0
        %730 = vmatpush2.msra.mxu0 0.0
        %731 = vmatprep.subr.mxu0 0.0
        %732 = vmatpush2.msra.mxu0 0.0
        %733 = vmatprep.subr.mxu0 0.0
        %734 = vmatpush2.msra.mxu0 0.0
        %735 = vmatprep.subr.mxu0 0.0
        %736 = vmatpush2.msra.mxu0 0.0
        %737 = vmatprep.subr.mxu0 0.0
        %738 = vmatpush2.msra.mxu0 0.0
        %739 = vmatprep.subr.mxu0 0.0
        %740 = vmatpush2.msra.mxu0 0.0
        %741 = vmatprep.subr.mxu0 0.0
        %742 = vmatpush2.msra.mxu0 0.0
        %743 = vmatprep.subr.mxu0 0.0
        %744 = vmatpush2.msra.mxu0 0.0
        %745 = vmatprep.subr.mxu0 0.0
        %746 = vmatpush2.msra.mxu0 0.0
        %747 = vmatprep.subr.mxu0 0.0
        %748 = vmatpush2.msra.mxu0 0.0
        %749 = vmatprep.subr.mxu0 0.0
        %750 = vmatpush2.msra.mxu0 0.0
        %751 = vmatprep.subr.mxu0 0.0
        %752 = vmatpush2.msra.mxu0 0.0
        %753 = vmatprep.subr.mxu0 0.0
        %754 = vmatpush2.msra.mxu0 0.0
        %755 = vmatprep.subr.mxu0 0.0
        %756 = vmatpush2.msra.mxu0 0.0
        %757 = vmatprep.subr.mxu0 0.0
        %758 = vmatpush2.msra.mxu0 0.0
        %759 = vmatprep.subr.mxu0 0.0
        %760 = vmatpush2.msra.mxu0 0.0
        %761 = vmatprep.mubr.f32.mxu0 0.0
        %762 = vmatmul.mubr.f32.gmra.mxu0 %v695
        %v763 = vpop.f32.mrf.mxu0
        %v764 = vadd.f32 0.0, %v763
        %v765 = vpop.f32.mrf.mxu0
        %766 = vdwg.mxu0
        %v767 = vld [vmem:[%s2 + $0x60] sm:$0xff]
        %v768 = vld [vmem:[%s2 + $0x68] sm:$0xff]
        %v769 = vld [vmem:[%s2 + $0x70] sm:$0xff]
        %v770 = vld [vmem:[%s2 + $0x78] sm:$0xff]
        %v771 = vld [vmem:[%s2 + $0x1a3] sm:$0x1]
        %v772 = vlaneseq
        %v773 = vshrl.u32 %v772, 7
        %v774 = vsub.s32 0, %v773
        %v775 = vrot.slane %v771, %v774
        %v777 = vsel %vm288, %v764, 0
        %779 = vmatprep.subr.mxu0 0.0
        %780 = vmatpush1.msra.mxu0 0.0
        %781 = vmatprep.subr.mxu0 0.0
        %782 = vmatpush1.msra.mxu0 0.0
        %783 = vmatprep.subr.mxu0 0.0
        %784 = vmatpush1.msra.mxu0 0.0
        %785 = vmatprep.subr.mxu0 0.0
        %786 = vmatpush1.msra.mxu0 0.0
        %787 = vmatprep.subr.mxu0 0.0
        %788 = vmatpush1.msra.mxu0 0.0
        %789 = vmatprep.subr.mxu0 0.0
        %790 = vmatpush1.msra.mxu0 0.0
        %791 = vmatprep.subr.mxu0 0.0
        %792 = vmatpush1.msra.mxu0 0.0
        %793 = vmatprep.subr.mxu0 0.0
        %794 = vmatpush1.msra.mxu0 0.0
        %795 = vmatprep.subr.mxu0 0.0
        %796 = vmatpush1.msra.mxu0 0.0
        %797 = vmatprep.subr.mxu0 0.0
        %798 = vmatpush1.msra.mxu0 0.0
        %799 = vmatprep.subr.mxu0 0.0
        %800 = vmatpush1.msra.mxu0 0.0
        %801 = vmatprep.subr.mxu0 0.0
        %802 = vmatpush1.msra.mxu0 0.0
        %803 = vmatprep.subr.mxu0 0.0
        %804 = vmatpush1.msra.mxu0 %v770
        %805 = vmatprep.subr.mxu0 0.0
        %806 = vmatpush1.msra.mxu0 %v769
        %807 = vmatprep.subr.mxu0 0.0
        %808 = vmatpush1.msra.mxu0 %v768
        %809 = vmatprep.subr.mxu0 0.0
        %810 = vmatpush1.msra.mxu0 %v767
        %811 = vmatprep.subr.mxu0 0.0
        %812 = vmatpush2.msra.mxu0 0.0
        %813 = vmatprep.subr.mxu0 0.0
        %814 = vmatpush2.msra.mxu0 0.0
        %815 = vmatprep.subr.mxu0 0.0
        %816 = vmatpush2.msra.mxu0 0.0
        %817 = vmatprep.subr.mxu0 0.0
        %818 = vmatpush2.msra.mxu0 0.0
        %819 = vmatprep.subr.mxu0 0.0
        %820 = vmatpush2.msra.mxu0 0.0
        %821 = vmatprep.subr.mxu0 0.0
        %822 = vmatpush2.msra.mxu0 0.0
        %823 = vmatprep.subr.mxu0 0.0
        %824 = vmatpush2.msra.mxu0 0.0
        %825 = vmatprep.subr.mxu0 0.0
        %826 = vmatpush2.msra.mxu0 0.0
        %827 = vmatprep.subr.mxu0 0.0
        %828 = vmatpush2.msra.mxu0 0.0
        %829 = vmatprep.subr.mxu0 0.0
        %830 = vmatpush2.msra.mxu0 0.0
        %831 = vmatprep.subr.mxu0 0.0
        %832 = vmatpush2.msra.mxu0 0.0
        %833 = vmatprep.subr.mxu0 0.0
        %834 = vmatpush2.msra.mxu0 0.0
        %835 = vmatprep.subr.mxu0 0.0
        %836 = vmatpush2.msra.mxu0 0.0
        %837 = vmatprep.subr.mxu0 0.0
        %838 = vmatpush2.msra.mxu0 0.0
        %839 = vmatprep.subr.mxu0 0.0
        %840 = vmatpush2.msra.mxu0 0.0
        %841 = vmatprep.subr.mxu0 0.0
        %842 = vmatpush2.msra.mxu0 0.0
        %843 = vmatprep.mubr.f32.mxu0 0.0
        %844 = vmatmul.mubr.f32.gmra.mxu0 %v777
        %v845 = vpop.f32.mrf.mxu0
        %v846 = vadd.f32 %v775, %v845
        %v847 = vpop.f32.mrf.mxu0
        %848 = vdwg.mxu0
        %v849 = vadd.f32 %v846, %v267
        %v850 = vsel %vm288, %v849, 0.0
        %851 = vadd.xlane.f32.xlu0 %v850
        %v852 = vpop.xlane.xlu0 %851
        %v853 = vrcp.pop 32.0
        %v854 = vmul.f32 %v852, %v853
        %v855 = vsub.f32 %v849, %v854
        %v856 = vmul.f32 %v855, %v855
        %v857 = vsel %vm288, %v856, 0.0
        %858 = vadd.xlane.f32.xlu0 %v857
        %v859 = vpop.xlane.xlu0 %858
        %v860 = vmul.f32 %v859, 0.032258064
        %v861 = vrsqrt.pop %v860
        %v862 = vmul.f32 %v860, %v861
        %vm863 = vcmp.eq.f32.partialorder %v860, inf
        %v864 = vsel %vm863, %v860, %v862
        %vm865 = vcmp.eq.f32.partialorder %v860, 0.0
        %v866 = vand.u32 %v860, 2147483648
        %v867 = vsel %vm865, %v866, %v864
        %v868 = vadd.f32 %v867, 1e-06
        %v869 = vrcp.pop %v868
        %v870 = vld [vmem:[%s2 + $0x1aa] sm:$0x1]
        %v871 = vmul.f32 %v855, %v869
        %v872 = vlaneseq
        %v873 = vshrl.u32 %v872, 7
        %v874 = vsub.s32 0, %v873
        %v875 = vrot.slane %v870, %v874
        %v876 = vmul.f32 %v875, %v871
        %v877 = vld [vmem:[%s2 + $0x1ab] sm:$0x1]
        %v878 = vlaneseq
        %v879 = vshrl.u32 %v878, 7
        %v880 = vsub.s32 0, %v879
        %v881 = vrot.slane %v877, %v880
        %v882 = vadd.f32 %v876, %v881
        %s883 = scalar_lea.vmem %s239, 8 [#allocation3]
        %v884 = vld [vmem:[%s883] sm:$0xff]
        %v885 = vld [vmem:[%s2 + $0x80] sm:$0xff]
        %v886 = vld [vmem:[%s2 + $0x88] sm:$0xff]
        %v887 = vld [vmem:[%s2 + $0x90] sm:$0xff]
        %v888 = vld [vmem:[%s2 + $0x98] sm:$0xff]
        %v889 = vld [vmem:[%s2 + $0x1a4] sm:$0x1]
        %v890 = vlaneseq
        %v891 = vshrl.u32 %v890, 7
        %v892 = vsub.s32 0, %v891
        %v893 = vrot.slane %v889, %v892
        %v895 = vsel %vm288, %v882, 0
        %897 = vmatprep.subr.mxu0 0.0
        %898 = vmatpush1.msra.mxu0 0.0
        %899 = vmatprep.subr.mxu0 0.0
        %900 = vmatpush1.msra.mxu0 0.0
        %901 = vmatprep.subr.mxu0 0.0
        %902 = vmatpush1.msra.mxu0 0.0
        %903 = vmatprep.subr.mxu0 0.0
        %904 = vmatpush1.msra.mxu0 0.0
        %905 = vmatprep.subr.mxu0 0.0
        %906 = vmatpush1.msra.mxu0 0.0
        %907 = vmatprep.subr.mxu0 0.0
        %908 = vmatpush1.msra.mxu0 0.0
        %909 = vmatprep.subr.mxu0 0.0
        %910 = vmatpush1.msra.mxu0 0.0
        %911 = vmatprep.subr.mxu0 0.0
        %912 = vmatpush1.msra.mxu0 0.0
        %913 = vmatprep.subr.mxu0 0.0
        %914 = vmatpush1.msra.mxu0 0.0
        %915 = vmatprep.subr.mxu0 0.0
        %916 = vmatpush1.msra.mxu0 0.0
        %917 = vmatprep.subr.mxu0 0.0
        %918 = vmatpush1.msra.mxu0 0.0
        %919 = vmatprep.subr.mxu0 0.0
        %920 = vmatpush1.msra.mxu0 0.0
        %921 = vmatprep.subr.mxu0 0.0
        %922 = vmatpush1.msra.mxu0 %v888
        %923 = vmatprep.subr.mxu0 0.0
        %924 = vmatpush1.msra.mxu0 %v887
        %925 = vmatprep.subr.mxu0 0.0
        %926 = vmatpush1.msra.mxu0 %v886
        %927 = vmatprep.subr.mxu0 0.0
        %928 = vmatpush1.msra.mxu0 %v885
        %929 = vmatprep.subr.mxu0 0.0
        %930 = vmatpush2.msra.mxu0 0.0
        %931 = vmatprep.subr.mxu0 0.0
        %932 = vmatpush2.msra.mxu0 0.0
        %933 = vmatprep.subr.mxu0 0.0
        %934 = vmatpush2.msra.mxu0 0.0
        %935 = vmatprep.subr.mxu0 0.0
        %936 = vmatpush2.msra.mxu0 0.0
        %937 = vmatprep.subr.mxu0 0.0
        %938 = vmatpush2.msra.mxu0 0.0
        %939 = vmatprep.subr.mxu0 0.0
        %940 = vmatpush2.msra.mxu0 0.0
        %941 = vmatprep.subr.mxu0 0.0
        %942 = vmatpush2.msra.mxu0 0.0
        %943 = vmatprep.subr.mxu0 0.0
        %944 = vmatpush2.msra.mxu0 0.0
        %945 = vmatprep.subr.mxu0 0.0
        %946 = vmatpush2.msra.mxu0 0.0
        %947 = vmatprep.subr.mxu0 0.0
        %948 = vmatpush2.msra.mxu0 0.0
        %949 = vmatprep.subr.mxu0 0.0
        %950 = vmatpush2.msra.mxu0 0.0
        %951 = vmatprep.subr.mxu0 0.0
        %952 = vmatpush2.msra.mxu0 0.0
        %953 = vmatprep.subr.mxu0 0.0
        %954 = vmatpush2.msra.mxu0 0.0
        %955 = vmatprep.subr.mxu0 0.0
        %956 = vmatpush2.msra.mxu0 0.0
        %957 = vmatprep.subr.mxu0 0.0
        %958 = vmatpush2.msra.mxu0 0.0
        %959 = vmatprep.subr.mxu0 0.0
        %960 = vmatpush2.msra.mxu0 0.0
        %961 = vmatprep.mubr.f32.mxu0 0.0
        %962 = vmatmul.mubr.f32.gmra.mxu0 %v895
        %v963 = vpop.f32.mrf.mxu0
        %v964 = vadd.f32 %v893, %v963
        %v965 = vpop.f32.mrf.mxu0
        %966 = vdwg.mxu0
        %v967 = vld [vmem:[%s2 + $0xa0] sm:$0xff]
        %v968 = vld [vmem:[%s2 + $0xa8] sm:$0xff]
        %v969 = vld [vmem:[%s2 + $0xb0] sm:$0xff]
        %v970 = vld [vmem:[%s2 + $0xb8] sm:$0xff]
        %v971 = vld [vmem:[%s2 + $0x1a5] sm:$0x1]
        %v972 = vlaneseq
        %v973 = vshrl.u32 %v972, 7
        %v974 = vsub.s32 0, %v973
        %v975 = vrot.slane %v971, %v974
        %v977 = vsel %vm288, %v269, 0
        %979 = vmatprep.subr.mxu0 0.0
        %980 = vmatpush1.msra.mxu0 0.0
        %981 = vmatprep.subr.mxu0 0.0
        %982 = vmatpush1.msra.mxu0 0.0
        %983 = vmatprep.subr.mxu0 0.0
        %984 = vmatpush1.msra.mxu0 0.0
        %985 = vmatprep.subr.mxu0 0.0
        %986 = vmatpush1.msra.mxu0 0.0
        %987 = vmatprep.subr.mxu0 0.0
        %988 = vmatpush1.msra.mxu0 0.0
        %989 = vmatprep.subr.mxu0 0.0
        %990 = vmatpush1.msra.mxu0 0.0
        %991 = vmatprep.subr.mxu0 0.0
        %992 = vmatpush1.msra.mxu0 0.0
        %993 = vmatprep.subr.mxu0 0.0
        %994 = vmatpush1.msra.mxu0 0.0
        %995 = vmatprep.subr.mxu0 0.0
        %996 = vmatpush1.msra.mxu0 0.0
        %997 = vmatprep.subr.mxu0 0.0
        %998 = vmatpush1.msra.mxu0 0.0
        %999 = vmatprep.subr.mxu0 0.0
        %1000 = vmatpush1.msra.mxu0 0.0
        %1001 = vmatprep.subr.mxu0 0.0
        %1002 = vmatpush1.msra.mxu0 0.0
        %1003 = vmatprep.subr.mxu0 0.0
        %1004 = vmatpush1.msra.mxu0 %v970
        %1005 = vmatprep.subr.mxu0 0.0
        %1006 = vmatpush1.msra.mxu0 %v969
        %1007 = vmatprep.subr.mxu0 0.0
        %1008 = vmatpush1.msra.mxu0 %v968
        %1009 = vmatprep.subr.mxu0 0.0
        %1010 = vmatpush1.msra.mxu0 %v967
        %1011 = vmatprep.subr.mxu0 0.0
        %1012 = vmatpush2.msra.mxu0 0.0
        %1013 = vmatprep.subr.mxu0 0.0
        %1014 = vmatpush2.msra.mxu0 0.0
        %1015 = vmatprep.subr.mxu0 0.0
        %1016 = vmatpush2.msra.mxu0 0.0
        %1017 = vmatprep.subr.mxu0 0.0
        %1018 = vmatpush2.msra.mxu0 0.0
        %1019 = vmatprep.subr.mxu0 0.0
        %1020 = vmatpush2.msra.mxu0 0.0
        %1021 = vmatprep.subr.mxu0 0.0
        %1022 = vmatpush2.msra.mxu0 0.0
        %1023 = vmatprep.subr.mxu0 0.0
        %1024 = vmatpush2.msra.mxu0 0.0
        %1025 = vmatprep.subr.mxu0 0.0
        %1026 = vmatpush2.msra.mxu0 0.0
        %1027 = vmatprep.subr.mxu0 0.0
        %1028 = vmatpush2.msra.mxu0 0.0
        %1029 = vmatprep.subr.mxu0 0.0
        %1030 = vmatpush2.msra.mxu0 0.0
        %1031 = vmatprep.subr.mxu0 0.0
        %1032 = vmatpush2.msra.mxu0 0.0
        %1033 = vmatprep.subr.mxu0 0.0
        %1034 = vmatpush2.msra.mxu0 0.0
        %1035 = vmatprep.subr.mxu0 0.0
        %1036 = vmatpush2.msra.mxu0 0.0
        %1037 = vmatprep.subr.mxu0 0.0
        %1038 = vmatpush2.msra.mxu0 0.0
        %1039 = vmatprep.subr.mxu0 0.0
        %1040 = vmatpush2.msra.mxu0 0.0
        %1041 = vmatprep.subr.mxu0 0.0
        %1042 = vmatpush2.msra.mxu0 0.0
        %1043 = vmatprep.mubr.f32.mxu0 0.0
        %1044 = vmatmul.mubr.f32.gmra.mxu0 %v977
        %v1045 = vpop.f32.mrf.mxu0
        %v1046 = vadd.f32 %v975, %v1045
        %v1047 = vpop.f32.mrf.mxu0
        %1048 = vdwg.mxu0
        %v1049 = vld [vmem:[%s2 + $0xc0] sm:$0xff]
        %v1050 = vld [vmem:[%s2 + $0xc8] sm:$0xff]
        %v1051 = vld [vmem:[%s2 + $0xd0] sm:$0xff]
        %v1052 = vld [vmem:[%s2 + $0xd8] sm:$0xff]
        %v1053 = vld [vmem:[%s2 + $0x1a6] sm:$0x1]
        %v1054 = vlaneseq
        %v1055 = vshrl.u32 %v1054, 7
        %v1056 = vsub.s32 0, %v1055
        %v1057 = vrot.slane %v1053, %v1056
        %1058 = vmatprep.subr.mxu0 0.0
        %1059 = vmatpush1.msra.mxu0 0.0
        %1060 = vmatprep.subr.mxu0 0.0
        %1061 = vmatpush1.msra.mxu0 0.0
        %1062 = vmatprep.subr.mxu0 0.0
        %1063 = vmatpush1.msra.mxu0 0.0
        %1064 = vmatprep.subr.mxu0 0.0
        %1065 = vmatpush1.msra.mxu0 0.0
        %1066 = vmatprep.subr.mxu0 0.0
        %1067 = vmatpush1.msra.mxu0 0.0
        %1068 = vmatprep.subr.mxu0 0.0
        %1069 = vmatpush1.msra.mxu0 0.0
        %1070 = vmatprep.subr.mxu0 0.0
        %1071 = vmatpush1.msra.mxu0 0.0
        %1072 = vmatprep.subr.mxu0 0.0
        %1073 = vmatpush1.msra.mxu0 0.0
        %1074 = vmatprep.subr.mxu0 0.0
        %1075 = vmatpush1.msra.mxu0 0.0
        %1076 = vmatprep.subr.mxu0 0.0
        %1077 = vmatpush1.msra.mxu0 0.0
        %1078 = vmatprep.subr.mxu0 0.0
        %1079 = vmatpush1.msra.mxu0 0.0
        %1080 = vmatprep.subr.mxu0 0.0
        %1081 = vmatpush1.msra.mxu0 0.0
        %1082 = vmatprep.subr.mxu0 0.0
        %1083 = vmatpush1.msra.mxu0 %v1052
        %1084 = vmatprep.subr.mxu0 0.0
        %1085 = vmatpush1.msra.mxu0 %v1051
        %1086 = vmatprep.subr.mxu0 0.0
        %1087 = vmatpush1.msra.mxu0 %v1050
        %1088 = vmatprep.subr.mxu0 0.0
        %1089 = vmatpush1.msra.mxu0 %v1049
        %1090 = vmatprep.subr.mxu0 0.0
        %1091 = vmatpush2.msra.mxu0 0.0
        %1092 = vmatprep.subr.mxu0 0.0
        %1093 = vmatpush2.msra.mxu0 0.0
        %1094 = vmatprep.subr.mxu0 0.0
        %1095 = vmatpush2.msra.mxu0 0.0
        %1096 = vmatprep.subr.mxu0 0.0
        %1097 = vmatpush2.msra.mxu0 0.0
        %1098 = vmatprep.subr.mxu0 0.0
        %1099 = vmatpush2.msra.mxu0 0.0
        %1100 = vmatprep.subr.mxu0 0.0
        %1101 = vmatpush2.msra.mxu0 0.0
        %1102 = vmatprep.subr.mxu0 0.0
        %1103 = vmatpush2.msra.mxu0 0.0
        %1104 = vmatprep.subr.mxu0 0.0
        %1105 = vmatpush2.msra.mxu0 0.0
        %1106 = vmatprep.subr.mxu0 0.0
        %1107 = vmatpush2.msra.mxu0 0.0
        %1108 = vmatprep.subr.mxu0 0.0
        %1109 = vmatpush2.msra.mxu0 0.0
        %1110 = vmatprep.subr.mxu0 0.0
        %1111 = vmatpush2.msra.mxu0 0.0
        %1112 = vmatprep.subr.mxu0 0.0
        %1113 = vmatpush2.msra.mxu0 0.0
        %1114 = vmatprep.subr.mxu0 0.0
        %1115 = vmatpush2.msra.mxu0 0.0
        %1116 = vmatprep.subr.mxu0 0.0
        %1117 = vmatpush2.msra.mxu0 0.0
        %1118 = vmatprep.subr.mxu0 0.0
        %1119 = vmatpush2.msra.mxu0 0.0
        %1120 = vmatprep.subr.mxu0 0.0
        %1121 = vmatpush2.msra.mxu0 0.0
        %1122 = vmatprep.mubr.f32.mxu0 0.0
        %1123 = vmatmul.mubr.f32.gmra.mxu0 %v977
        %v1124 = vpop.f32.mrf.mxu0
        %v1125 = vadd.f32 %v1057, %v1124
        %v1126 = vpop.f32.mrf.mxu0
        %1127 = vdwg.mxu0
        %v1128 = vmul.f32 %v1046, %v270
        %v1129 = vmul.f32 %v1046, %v271
        %v1130 = vmul.f32 %v1046, %v272
        %v1131 = vmul.f32 %v1046, %v273
        %v1132 = vmul.f32 %v1125, %v270
        %v1133 = vmul.f32 %v1125, %v271
        %v1134 = vmul.f32 %v1125, %v272
        %v1135 = vmul.f32 %v1125, %v273
        %v1137 = vsel %vm288, %v964, 0
        %v1140 = vsel %vm288, %v1128, 0
        %v1143 = vsel %vm288, %v1129, 0
        %v1146 = vsel %vm288, %v1130, 0
        %v1149 = vsel %vm288, %v1131, 0
        %1151 = vmatprep.subr.mxu0 0.0
        %1152 = vmatpush1.xpose.msra.mxu0 0.0
        %1153 = vmatprep.subr.mxu0 0.0
        %1154 = vmatpush1.xpose.msra.mxu0 0.0
        %1155 = vmatprep.subr.mxu0 0.0
        %1156 = vmatpush1.xpose.msra.mxu0 0.0
        %1157 = vmatprep.subr.mxu0 0.0
        %1158 = vmatpush1.xpose.msra.mxu0 0.0
        %1159 = vmatprep.subr.mxu0 0.0
        %1160 = vmatpush1.xpose.msra.mxu0 0.0
        %1161 = vmatprep.subr.mxu0 0.0
        %1162 = vmatpush1.xpose.msra.mxu0 0.0
        %1163 = vmatprep.subr.mxu0 0.0
        %1164 = vmatpush1.xpose.msra.mxu0 0.0
        %1165 = vmatprep.subr.mxu0 0.0
        %1166 = vmatpush1.xpose.msra.mxu0 0.0
        %1167 = vmatprep.subr.mxu0 0.0
        %1168 = vmatpush1.xpose.msra.mxu0 0.0
        %1169 = vmatprep.subr.mxu0 0.0
        %1170 = vmatpush1.xpose.msra.mxu0 0.0
        %1171 = vmatprep.subr.mxu0 0.0
        %1172 = vmatpush1.xpose.msra.mxu0 0.0
        %1173 = vmatprep.subr.mxu0 0.0
        %1174 = vmatpush1.xpose.msra.mxu0 0.0
        %1175 = vmatprep.subr.mxu0 0.0
        %1176 = vmatpush1.xpose.msra.mxu0 %v1149
        %1177 = vmatprep.subr.mxu0 0.0
        %1178 = vmatpush1.xpose.msra.mxu0 %v1146
        %1179 = vmatprep.subr.mxu0 0.0
        %1180 = vmatpush1.xpose.msra.mxu0 %v1143
        %1181 = vmatprep.subr.mxu0 0.0
        %1182 = vmatpush1.xpose.msra.mxu0 %v1140
        %1183 = vmatprep.subr.mxu0 0.0
        %1184 = vmatpush2.xpose.msra.mxu0 0.0
        %1185 = vmatprep.subr.mxu0 0.0
        %1186 = vmatpush2.xpose.msra.mxu0 0.0
        %1187 = vmatprep.subr.mxu0 0.0
        %1188 = vmatpush2.xpose.msra.mxu0 0.0
        %1189 = vmatprep.subr.mxu0 0.0
        %1190 = vmatpush2.xpose.msra.mxu0 0.0
        %1191 = vmatprep.subr.mxu0 0.0
        %1192 = vmatpush2.xpose.msra.mxu0 0.0
        %1193 = vmatprep.subr.mxu0 0.0
        %1194 = vmatpush2.xpose.msra.mxu0 0.0
        %1195 = vmatprep.subr.mxu0 0.0
        %1196 = vmatpush2.xpose.msra.mxu0 0.0
        %1197 = vmatprep.subr.mxu0 0.0
        %1198 = vmatpush2.xpose.msra.mxu0 0.0
        %1199 = vmatprep.subr.mxu0 0.0
        %1200 = vmatpush2.xpose.msra.mxu0 0.0
        %1201 = vmatprep.subr.mxu0 0.0
        %1202 = vmatpush2.xpose.msra.mxu0 0.0
        %1203 = vmatprep.subr.mxu0 0.0
        %1204 = vmatpush2.xpose.msra.mxu0 0.0
        %1205 = vmatprep.subr.mxu0 0.0
        %1206 = vmatpush2.xpose.msra.mxu0 0.0
        %1207 = vmatprep.subr.mxu0 0.0
        %1208 = vmatpush2.xpose.msra.mxu0 0.0
        %1209 = vmatprep.subr.mxu0 0.0
        %1210 = vmatpush2.xpose.msra.mxu0 0.0
        %1211 = vmatprep.subr.mxu0 0.0
        %1212 = vmatpush2.xpose.msra.mxu0 0.0
        %1213 = vmatprep.subr.mxu0 0.0
        %1214 = vmatpush2.xpose.msra.mxu0 0.0
        %1215 = vmatprep.mubr.f32.mxu0 0.0
        %1216 = vmatmul.mubr.f32.gmra.mxu0 %v1137
        %v1217 = vpop.f32.mrf.mxu0
        %v1218 = vadd.f32 %v884, %v1217
        %v1219 = vpop.f32.mrf.mxu0
        %1220 = vdwg.mxu0
        %v1221 = vsel %vm288, %v1218, -inf
        %1222 = vmax.xlane.f32.xlu0 %v1221
        %v1223 = vpop.xlane.xlu0 %1222
        %v1224 = vsub.f32 %v1218, %v1223
        %v1225 = vmul.f32 %v1224, 1.442695
        %v1226 = vpow.pop %v1225
        %v1228 = vsel %vm288, %v1226, 0
        %1230 = vmatprep.subr.mxu0 0.0
        %1231 = vmatpush1.msra.mxu0 0.0
        %1232 = vmatprep.subr.mxu0 0.0
        %1233 = vmatpush1.msra.mxu0 0.0
        %1234 = vmatprep.subr.mxu0 0.0
        %1235 = vmatpush1.msra.mxu0 0.0
        %1236 = vmatprep.subr.mxu0 0.0
        %1237 = vmatpush1.msra.mxu0 0.0
        %1238 = vmatprep.subr.mxu0 0.0
        %1239 = vmatpush1.msra.mxu0 0.0
        %1240 = vmatprep.subr.mxu0 0.0
        %1241 = vmatpush1.msra.mxu0 0.0
        %1242 = vmatprep.subr.mxu0 0.0
        %1243 = vmatpush1.msra.mxu0 0.0
        %1244 = vmatprep.subr.mxu0 0.0
        %1245 = vmatpush1.msra.mxu0 0.0
        %1246 = vmatprep.subr.mxu0 0.0
        %1247 = vmatpush1.msra.mxu0 0.0
        %1248 = vmatprep.subr.mxu0 0.0
        %1249 = vmatpush1.msra.mxu0 0.0
        %1250 = vmatprep.subr.mxu0 0.0
        %1251 = vmatpush1.msra.mxu0 0.0
        %1252 = vmatprep.subr.mxu0 0.0
        %1253 = vmatpush1.msra.mxu0 0.0
        %1254 = vmatprep.subr.mxu0 0.0
        %1255 = vmatpush1.msra.mxu0 %v277
        %1256 = vmatprep.subr.mxu0 0.0
        %1257 = vmatpush1.msra.mxu0 %v276
        %1258 = vmatprep.subr.mxu0 0.0
        %1259 = vmatpush1.msra.mxu0 %v275
        %1260 = vmatprep.subr.mxu0 0.0
        %1261 = vmatpush1.msra.mxu0 %v274
        %1262 = vmatprep.subr.mxu0 0.0
        %1263 = vmatpush2.msra.mxu0 0.0
        %1264 = vmatprep.subr.mxu0 0.0
        %1265 = vmatpush2.msra.mxu0 0.0
        %1266 = vmatprep.subr.mxu0 0.0
        %1267 = vmatpush2.msra.mxu0 0.0
        %1268 = vmatprep.subr.mxu0 0.0
        %1269 = vmatpush2.msra.mxu0 0.0
        %1270 = vmatprep.subr.mxu0 0.0
        %1271 = vmatpush2.msra.mxu0 0.0
        %1272 = vmatprep.subr.mxu0 0.0
        %1273 = vmatpush2.msra.mxu0 0.0
        %1274 = vmatprep.subr.mxu0 0.0
        %1275 = vmatpush2.msra.mxu0 0.0
        %1276 = vmatprep.subr.mxu0 0.0
        %1277 = vmatpush2.msra.mxu0 0.0
        %1278 = vmatprep.subr.mxu0 0.0
        %1279 = vmatpush2.msra.mxu0 0.0
        %1280 = vmatprep.subr.mxu0 0.0
        %1281 = vmatpush2.msra.mxu0 0.0
        %1282 = vmatprep.subr.mxu0 0.0
        %1283 = vmatpush2.msra.mxu0 0.0
        %1284 = vmatprep.subr.mxu0 0.0
        %1285 = vmatpush2.msra.mxu0 0.0
        %1286 = vmatprep.subr.mxu0 0.0
        %1287 = vmatpush2.msra.mxu0 0.0
        %1288 = vmatprep.subr.mxu0 0.0
        %1289 = vmatpush2.msra.mxu0 0.0
        %1290 = vmatprep.subr.mxu0 0.0
        %1291 = vmatpush2.msra.mxu0 0.0
        %1292 = vmatprep.subr.mxu0 0.0
        %1293 = vmatpush2.msra.mxu0 0.0
        %1294 = vmatprep.mubr.f32.mxu0 0.0
        %1295 = vmatmul.mubr.f32.gmra.mxu0 %v1228
        %v1296 = vpop.f32.mrf.mxu0
        %v1297 = vadd.f32 0.0, %v1296
        %v1298 = vpop.f32.mrf.mxu0
        %1299 = vdwg.mxu0
        %v1300 = vrcp.pop %v1297
        %v1301 = vmul.f32 %v1226, %v1300
        %v1303 = vsel %vm288, %v1301, 0
        %1305 = vmatprep.subr.mxu0 0.0
        %1306 = vmatpush1.msra.mxu0 0.0
        %1307 = vmatprep.subr.mxu0 0.0
        %1308 = vmatpush1.msra.mxu0 0.0
        %1309 = vmatprep.subr.mxu0 0.0
        %1310 = vmatpush1.msra.mxu0 0.0
        %1311 = vmatprep.subr.mxu0 0.0
        %1312 = vmatpush1.msra.mxu0 0.0
        %1313 = vmatprep.subr.mxu0 0.0
        %1314 = vmatpush1.msra.mxu0 0.0
        %1315 = vmatprep.subr.mxu0 0.0
        %1316 = vmatpush1.msra.mxu0 0.0
        %1317 = vmatprep.subr.mxu0 0.0
        %1318 = vmatpush1.msra.mxu0 0.0
        %1319 = vmatprep.subr.mxu0 0.0
        %1320 = vmatpush1.msra.mxu0 0.0
        %1321 = vmatprep.subr.mxu0 0.0
        %1322 = vmatpush1.msra.mxu0 0.0
        %1323 = vmatprep.subr.mxu0 0.0
        %1324 = vmatpush1.msra.mxu0 0.0
        %1325 = vmatprep.subr.mxu0 0.0
        %1326 = vmatpush1.msra.mxu0 0.0
        %1327 = vmatprep.subr.mxu0 0.0
        %1328 = vmatpush1.msra.mxu0 0.0
        %1329 = vmatprep.subr.mxu0 0.0
        %1330 = vmatpush1.msra.mxu0 %v1135
        %1331 = vmatprep.subr.mxu0 0.0
        %1332 = vmatpush1.msra.mxu0 %v1134
        %1333 = vmatprep.subr.mxu0 0.0
        %1334 = vmatpush1.msra.mxu0 %v1133
        %1335 = vmatprep.subr.mxu0 0.0
        %1336 = vmatpush1.msra.mxu0 %v1132
        %1337 = vmatprep.subr.mxu0 0.0
        %1338 = vmatpush2.msra.mxu0 0.0
        %1339 = vmatprep.subr.mxu0 0.0
        %1340 = vmatpush2.msra.mxu0 0.0
        %1341 = vmatprep.subr.mxu0 0.0
        %1342 = vmatpush2.msra.mxu0 0.0
        %1343 = vmatprep.subr.mxu0 0.0
        %1344 = vmatpush2.msra.mxu0 0.0
        %1345 = vmatprep.subr.mxu0 0.0
        %1346 = vmatpush2.msra.mxu0 0.0
        %1347 = vmatprep.subr.mxu0 0.0
        %1348 = vmatpush2.msra.mxu0 0.0
        %1349 = vmatprep.subr.mxu0 0.0
        %1350 = vmatpush2.msra.mxu0 0.0
        %1351 = vmatprep.subr.mxu0 0.0
        %1352 = vmatpush2.msra.mxu0 0.0
        %1353 = vmatprep.subr.mxu0 0.0
        %1354 = vmatpush2.msra.mxu0 0.0
        %1355 = vmatprep.subr.mxu0 0.0
        %1356 = vmatpush2.msra.mxu0 0.0
        %1357 = vmatprep.subr.mxu0 0.0
        %1358 = vmatpush2.msra.mxu0 0.0
        %1359 = vmatprep.subr.mxu0 0.0
        %1360 = vmatpush2.msra.mxu0 0.0
        %1361 = vmatprep.subr.mxu0 0.0
        %1362 = vmatpush2.msra.mxu0 0.0
        %1363 = vmatprep.subr.mxu0 0.0
        %1364 = vmatpush2.msra.mxu0 0.0
        %1365 = vmatprep.subr.mxu0 0.0
        %1366 = vmatpush2.msra.mxu0 0.0
        %1367 = vmatprep.subr.mxu0 0.0
        %1368 = vmatpush2.msra.mxu0 0.0
        %1369 = vmatprep.mubr.f32.mxu0 0.0
        %1370 = vmatmul.mubr.f32.gmra.mxu0 %v1303
        %v1371 = vpop.f32.mrf.mxu0
        %v1372 = vadd.f32 0.0, %v1371
        %v1373 = vpop.f32.mrf.mxu0
        %1374 = vdwg.mxu0
        %v1375 = vld [vmem:[%s2 + $0xe0] sm:$0xff]
        %v1376 = vld [vmem:[%s2 + $0xe8] sm:$0xff]
        %v1377 = vld [vmem:[%s2 + $0xf0] sm:$0xff]
        %v1378 = vld [vmem:[%s2 + $0xf8] sm:$0xff]
        %v1379 = vld [vmem:[%s2 + $0x1a7] sm:$0x1]
        %v1380 = vlaneseq
        %v1381 = vshrl.u32 %v1380, 7
        %v1382 = vsub.s32 0, %v1381
        %v1383 = vrot.slane %v1379, %v1382
        %v1385 = vsel %vm288, %v1372, 0
        %1387 = vmatprep.subr.mxu0 0.0
        %1388 = vmatpush1.msra.mxu0 0.0
        %1389 = vmatprep.subr.mxu0 0.0
        %1390 = vmatpush1.msra.mxu0 0.0
        %1391 = vmatprep.subr.mxu0 0.0
        %1392 = vmatpush1.msra.mxu0 0.0
        %1393 = vmatprep.subr.mxu0 0.0
        %1394 = vmatpush1.msra.mxu0 0.0
        %1395 = vmatprep.subr.mxu0 0.0
        %1396 = vmatpush1.msra.mxu0 0.0
        %1397 = vmatprep.subr.mxu0 0.0
        %1398 = vmatpush1.msra.mxu0 0.0
        %1399 = vmatprep.subr.mxu0 0.0
        %1400 = vmatpush1.msra.mxu0 0.0
        %1401 = vmatprep.subr.mxu0 0.0
        %1402 = vmatpush1.msra.mxu0 0.0
        %1403 = vmatprep.subr.mxu0 0.0
        %1404 = vmatpush1.msra.mxu0 0.0
        %1405 = vmatprep.subr.mxu0 0.0
        %1406 = vmatpush1.msra.mxu0 0.0
        %1407 = vmatprep.subr.mxu0 0.0
        %1408 = vmatpush1.msra.mxu0 0.0
        %1409 = vmatprep.subr.mxu0 0.0
        %1410 = vmatpush1.msra.mxu0 0.0
        %1411 = vmatprep.subr.mxu0 0.0
        %1412 = vmatpush1.msra.mxu0 %v1378
        %1413 = vmatprep.subr.mxu0 0.0
        %1414 = vmatpush1.msra.mxu0 %v1377
        %1415 = vmatprep.subr.mxu0 0.0
        %1416 = vmatpush1.msra.mxu0 %v1376
        %1417 = vmatprep.subr.mxu0 0.0
        %1418 = vmatpush1.msra.mxu0 %v1375
        %1419 = vmatprep.subr.mxu0 0.0
        %1420 = vmatpush2.msra.mxu0 0.0
        %1421 = vmatprep.subr.mxu0 0.0
        %1422 = vmatpush2.msra.mxu0 0.0
        %1423 = vmatprep.subr.mxu0 0.0
        %1424 = vmatpush2.msra.mxu0 0.0
        %1425 = vmatprep.subr.mxu0 0.0
        %1426 = vmatpush2.msra.mxu0 0.0
        %1427 = vmatprep.subr.mxu0 0.0
        %1428 = vmatpush2.msra.mxu0 0.0
        %1429 = vmatprep.subr.mxu0 0.0
        %1430 = vmatpush2.msra.mxu0 0.0
        %1431 = vmatprep.subr.mxu0 0.0
        %1432 = vmatpush2.msra.mxu0 0.0
        %1433 = vmatprep.subr.mxu0 0.0
        %1434 = vmatpush2.msra.mxu0 0.0
        %1435 = vmatprep.subr.mxu0 0.0
        %1436 = vmatpush2.msra.mxu0 0.0
        %1437 = vmatprep.subr.mxu0 0.0
        %1438 = vmatpush2.msra.mxu0 0.0
        %1439 = vmatprep.subr.mxu0 0.0
        %1440 = vmatpush2.msra.mxu0 0.0
        %1441 = vmatprep.subr.mxu0 0.0
        %1442 = vmatpush2.msra.mxu0 0.0
        %1443 = vmatprep.subr.mxu0 0.0
        %1444 = vmatpush2.msra.mxu0 0.0
        %1445 = vmatprep.subr.mxu0 0.0
        %1446 = vmatpush2.msra.mxu0 0.0
        %1447 = vmatprep.subr.mxu0 0.0
        %1448 = vmatpush2.msra.mxu0 0.0
        %1449 = vmatprep.subr.mxu0 0.0
        %1450 = vmatpush2.msra.mxu0 0.0
        %1451 = vmatprep.mubr.f32.mxu0 0.0
        %1452 = vmatmul.mubr.f32.gmra.mxu0 %v1385
        %v1453 = vpop.f32.mrf.mxu0
        %v1454 = vadd.f32 %v1383, %v1453
        %v1455 = vpop.f32.mrf.mxu0
        %1456 = vdwg.mxu0
        %v1457 = vadd.f32 %v1454, %v882
        %v1458 = vsel %vm288, %v1457, 0.0
        %1459 = vadd.xlane.f32.xlu0 %v1458
        %v1460 = vpop.xlane.xlu0 %1459
        %v1461 = vmul.f32 %v1460, %v853
        %v1462 = vsub.f32 %v1457, %v1461
        %v1463 = vmul.f32 %v1462, %v1462
        %v1464 = vsel %vm288, %v1463, 0.0
        %1465 = vadd.xlane.f32.xlu0 %v1464
        %v1466 = vpop.xlane.xlu0 %1465
        %v1467 = vmul.f32 %v1466, 0.032258064
        %v1468 = vrsqrt.pop %v1467
        %v1469 = vmul.f32 %v1467, %v1468
        %vm1470 = vcmp.eq.f32.partialorder %v1467, inf
        %v1471 = vsel %vm1470, %v1467, %v1469
        %vm1472 = vcmp.eq.f32.partialorder %v1467, 0.0
        %v1473 = vand.u32 %v1467, 2147483648
        %v1474 = vsel %vm1472, %v1473, %v1471
        %v1475 = vadd.f32 %v1474, 1e-06
        %v1476 = vrcp.pop %v1475
        %v1477 = vld [vmem:[%s2 + $0x1ac] sm:$0x1]
        %v1478 = vmul.f32 %v1462, %v1476
        %v1479 = vlaneseq
        %v1480 = vshrl.u32 %v1479, 7
        %v1481 = vsub.s32 0, %v1480
        %v1482 = vrot.slane %v1477, %v1481
        %v1483 = vmul.f32 %v1482, %v1478
        %v1484 = vld [vmem:[%s2 + $0x1ad] sm:$0x1]
        %v1485 = vlaneseq
        %v1486 = vshrl.u32 %v1485, 7
        %v1487 = vsub.s32 0, %v1486
        %v1488 = vrot.slane %v1484, %v1487
        %v1489 = vadd.f32 %v1483, %v1488
        %v1490 = vld [vmem:[%s2 + $0x100] sm:$0xff]
        %v1491 = vld [vmem:[%s2 + $0x108] sm:$0xff]
        %v1492 = vld [vmem:[%s2 + $0x110] sm:$0xff]
        %v1493 = vld [vmem:[%s2 + $0x118] sm:$0xff]
        %v1494 = vld [vmem:[%s2 + $0x1a8] sm:$0x1]
        %v1495 = vlaneseq
        %v1496 = vshrl.u32 %v1495, 7
        %v1497 = vsub.s32 0, %v1496
        %v1498 = vrot.slane %v1494, %v1497
        %v1500 = vsel %vm288, %v1489, 0
        %1502 = vmatprep.subr.mxu0 0.0
        %1503 = vmatpush1.msra.mxu0 0.0
        %1504 = vmatprep.subr.mxu0 0.0
        %1505 = vmatpush1.msra.mxu0 0.0
        %1506 = vmatprep.subr.mxu0 0.0
        %1507 = vmatpush1.msra.mxu0 0.0
        %1508 = vmatprep.subr.mxu0 0.0
        %1509 = vmatpush1.msra.mxu0 0.0
        %1510 = vmatprep.subr.mxu0 0.0
        %1511 = vmatpush1.msra.mxu0 0.0
        %1512 = vmatprep.subr.mxu0 0.0
        %1513 = vmatpush1.msra.mxu0 0.0
        %1514 = vmatprep.subr.mxu0 0.0
        %1515 = vmatpush1.msra.mxu0 0.0
        %1516 = vmatprep.subr.mxu0 0.0
        %1517 = vmatpush1.msra.mxu0 0.0
        %1518 = vmatprep.subr.mxu0 0.0
        %1519 = vmatpush1.msra.mxu0 0.0
        %1520 = vmatprep.subr.mxu0 0.0
        %1521 = vmatpush1.msra.mxu0 0.0
        %1522 = vmatprep.subr.mxu0 0.0
        %1523 = vmatpush1.msra.mxu0 0.0
        %1524 = vmatprep.subr.mxu0 0.0
        %1525 = vmatpush1.msra.mxu0 0.0
        %1526 = vmatprep.subr.mxu0 0.0
        %1527 = vmatpush1.msra.mxu0 %v1493
        %1528 = vmatprep.subr.mxu0 0.0
        %1529 = vmatpush1.msra.mxu0 %v1492
        %1530 = vmatprep.subr.mxu0 0.0
        %1531 = vmatpush1.msra.mxu0 %v1491
        %1532 = vmatprep.subr.mxu0 0.0
        %1533 = vmatpush1.msra.mxu0 %v1490
        %1534 = vmatprep.subr.mxu0 0.0
        %1535 = vmatpush2.msra.mxu0 0.0
        %1536 = vmatprep.subr.mxu0 0.0
        %1537 = vmatpush2.msra.mxu0 0.0
        %1538 = vmatprep.subr.mxu0 0.0
        %1539 = vmatpush2.msra.mxu0 0.0
        %1540 = vmatprep.subr.mxu0 0.0
        %1541 = vmatpush2.msra.mxu0 0.0
        %1542 = vmatprep.subr.mxu0 0.0
        %1543 = vmatpush2.msra.mxu0 0.0
        %1544 = vmatprep.subr.mxu0 0.0
        %1545 = vmatpush2.msra.mxu0 0.0
        %1546 = vmatprep.subr.mxu0 0.0
        %1547 = vmatpush2.msra.mxu0 0.0
        %1548 = vmatprep.subr.mxu0 0.0
        %1549 = vmatpush2.msra.mxu0 0.0
        %1550 = vmatprep.subr.mxu0 0.0
        %1551 = vmatpush2.msra.mxu0 0.0
        %1552 = vmatprep.subr.mxu0 0.0
        %1553 = vmatpush2.msra.mxu0 0.0
        %1554 = vmatprep.subr.mxu0 0.0
        %1555 = vmatpush2.msra.mxu0 0.0
        %1556 = vmatprep.subr.mxu0 0.0
        %1557 = vmatpush2.msra.mxu0 0.0
        %1558 = vmatprep.subr.mxu0 0.0
        %1559 = vmatpush2.msra.mxu0 0.0
        %1560 = vmatprep.subr.mxu0 0.0
        %1561 = vmatpush2.msra.mxu0 0.0
        %1562 = vmatprep.subr.mxu0 0.0
        %1563 = vmatpush2.msra.mxu0 0.0
        %1564 = vmatprep.subr.mxu0 0.0
        %1565 = vmatpush2.msra.mxu0 0.0
        %1566 = vmatprep.mubr.f32.mxu0 0.0
        %1567 = vmatmul.mubr.f32.gmra.mxu0 %v1500
        %v1568 = vpop.f32.mrf.mxu0
        %v1569 = vadd.f32 %v1498, %v1568
        %v1570 = vpop.f32.mrf.mxu0
        %1571 = vdwg.mxu0
        %v1572 = vmul.f32 %v1569, 0.5
        %v1573 = vmul.f32 %v1569, 0.7978846
        %v1574 = vmul.f32 %v1569, 0.044715
        %v1575 = vmul.f32 %v1574, %v1569
        %v1576 = vadd.f32 %v1575, 1.0
        %v1577 = vmul.f32 %v1573, %v1576
        %v1578 = vtanh.pop %v1577
        %v1579 = vadd.f32 %v1578, 1.0
        %v1580 = vmul.f32 %v1572, %v1579
        %v1581 = vld [vmem:[%s2 + $0x120] sm:$0xff]
        %v1582 = vld [vmem:[%s2 + $0x128] sm:$0xff]
        %v1583 = vld [vmem:[%s2 + $0x130] sm:$0xff]
        %v1584 = vld [vmem:[%s2 + $0x138] sm:$0xff]
        %v1585 = vld [vmem:[%s2 + $0x140] sm:$0xff]
        %v1586 = vld [vmem:[%s2 + $0x148] sm:$0xff]
        %v1587 = vld [vmem:[%s2 + $0x150] sm:$0xff]
        %v1588 = vld [vmem:[%s2 + $0x158] sm:$0xff]
        %v1589 = vld [vmem:[%s2 + $0x1a9] sm:$0x1]
        %v1590 = vlaneseq
        %v1591 = vshrl.u32 %v1590, 7
        %v1592 = vsub.s32 0, %v1591
        %v1593 = vrot.slane %v1589, %v1592
        %vm1594 = vcmask 523264
        %v1596 = vsel %vm1594, %v1580, 0
        %1598 = vmatprep.subr.mxu0 0.0
        %1599 = vmatpush1.msra.mxu0 0.0
        %1600 = vmatprep.subr.mxu0 0.0
        %1601 = vmatpush1.msra.mxu0 0.0
        %1602 = vmatprep.subr.mxu0 0.0
        %1603 = vmatpush1.msra.mxu0 0.0
        %1604 = vmatprep.subr.mxu0 0.0
        %1605 = vmatpush1.msra.mxu0 0.0
        %1606 = vmatprep.subr.mxu0 0.0
        %1607 = vmatpush1.msra.mxu0 0.0
        %1608 = vmatprep.subr.mxu0 0.0
        %1609 = vmatpush1.msra.mxu0 0.0
        %1610 = vmatprep.subr.mxu0 0.0
        %1611 = vmatpush1.msra.mxu0 0.0
        %1612 = vmatprep.subr.mxu0 0.0
        %1613 = vmatpush1.msra.mxu0 0.0
        %1614 = vmatprep.subr.mxu0 0.0
        %1615 = vmatpush1.msra.mxu0 %v1588
        %1616 = vmatprep.subr.mxu0 0.0
        %1617 = vmatpush1.msra.mxu0 %v1587
        %1618 = vmatprep.subr.mxu0 0.0
        %1619 = vmatpush1.msra.mxu0 %v1586
        %1620 = vmatprep.subr.mxu0 0.0
        %1621 = vmatpush1.msra.mxu0 %v1585
        %1622 = vmatprep.subr.mxu0 0.0
        %1623 = vmatpush1.msra.mxu0 %v1584
        %1624 = vmatprep.subr.mxu0 0.0
        %1625 = vmatpush1.msra.mxu0 %v1583
        %1626 = vmatprep.subr.mxu0 0.0
        %1627 = vmatpush1.msra.mxu0 %v1582
        %1628 = vmatprep.subr.mxu0 0.0
        %1629 = vmatpush1.msra.mxu0 %v1581
        %1630 = vmatprep.subr.mxu0 0.0
        %1631 = vmatpush2.msra.mxu0 0.0
        %1632 = vmatprep.subr.mxu0 0.0
        %1633 = vmatpush2.msra.mxu0 0.0
        %1634 = vmatprep.subr.mxu0 0.0
        %1635 = vmatpush2.msra.mxu0 0.0
        %1636 = vmatprep.subr.mxu0 0.0
        %1637 = vmatpush2.msra.mxu0 0.0
        %1638 = vmatprep.subr.mxu0 0.0
        %1639 = vmatpush2.msra.mxu0 0.0
        %1640 = vmatprep.subr.mxu0 0.0
        %1641 = vmatpush2.msra.mxu0 0.0
        %1642 = vmatprep.subr.mxu0 0.0
        %1643 = vmatpush2.msra.mxu0 0.0
        %1644 = vmatprep.subr.mxu0 0.0
        %1645 = vmatpush2.msra.mxu0 0.0
        %1646 = vmatprep.subr.mxu0 0.0
        %1647 = vmatpush2.msra.mxu0 0.0
        %1648 = vmatprep.subr.mxu0 0.0
        %1649 = vmatpush2.msra.mxu0 0.0
        %1650 = vmatprep.subr.mxu0 0.0
        %1651 = vmatpush2.msra.mxu0 0.0
        %1652 = vmatprep.subr.mxu0 0.0
        %1653 = vmatpush2.msra.mxu0 0.0
        %1654 = vmatprep.subr.mxu0 0.0
        %1655 = vmatpush2.msra.mxu0 0.0
        %1656 = vmatprep.subr.mxu0 0.0
        %1657 = vmatpush2.msra.mxu0 0.0
        %1658 = vmatprep.subr.mxu0 0.0
        %1659 = vmatpush2.msra.mxu0 0.0
        %1660 = vmatprep.subr.mxu0 0.0
        %1661 = vmatpush2.msra.mxu0 0.0
        %1662 = vmatprep.mubr.f32.mxu0 0.0
        %1663 = vmatmul.mubr.f32.gmra.mxu0 %v1596
        %v1664 = vpop.f32.mrf.mxu0
        %v1665 = vadd.f32 %v1593, %v1664
        %v1666 = vpop.f32.mrf.mxu0
        %1667 = vdwg.mxu0
        %v1668 = vadd.f32 %v1665, %v1489
        %v1669 = vsel %vm288, %v1668, 0.0
        %1670 = vadd.xlane.f32.xlu0 %v1669
        %v1671 = vpop.xlane.xlu0 %1670
        %v1672 = vmul.f32 %v1671, %v853
        %v1673 = vsub.f32 %v1668, %v1672
        %v1674 = vmul.f32 %v1673, %v1673
        %v1675 = vsel %vm288, %v1674, 0.0
        %1676 = vadd.xlane.f32.xlu0 %v1675
        %v1677 = vpop.xlane.xlu0 %1676
        %v1678 = vmul.f32 %v1677, 0.032258064
        %v1679 = vrsqrt.pop %v1678
        %v1680 = vmul.f32 %v1678, %v1679
        %vm1681 = vcmp.eq.f32.partialorder %v1678, inf
        %v1682 = vsel %vm1681, %v1678, %v1680
        %vm1683 = vcmp.eq.f32.partialorder %v1678, 0.0
        %v1684 = vand.u32 %v1678, 2147483648
        %v1685 = vsel %vm1683, %v1684, %v1682
        %v1686 = vadd.f32 %v1685, 1e-06
        %v1687 = vrcp.pop %v1686
        %v1688 = vld [vmem:[%s2 + $0x1ae] sm:$0x1]
        %v1689 = vmul.f32 %v1673, %v1687
        %v1690 = vlaneseq
        %v1691 = vshrl.u32 %v1690, 7
        %v1692 = vsub.s32 0, %v1691
        %v1693 = vrot.slane %v1688, %v1692
        %v1694 = vmul.f32 %v1693, %v1689
        %v1695 = vld [vmem:[%s2 + $0x1af] sm:$0x1]
        %v1696 = vlaneseq
        %v1697 = vshrl.u32 %v1696, 7
        %v1698 = vsub.s32 0, %v1697
        %v1699 = vrot.slane %v1695, %v1698
        %v1700 = vadd.f32 %v1694, %v1699
        %v1702 = vrot.slane %v1700, 1
        %1703 = vrot.lane.b32.xlu0 %v1702, 32
        %v1704 = vpop.permute.xlu0 %1703
        %v1706 = vrot.slane %v1700, 2
        %1707 = vrot.lane.b32.xlu0 %v1706, 64
        %v1708 = vpop.permute.xlu0 %1707
        %v1710 = vrot.slane %v1700, 3
        %1711 = vrot.lane.b32.xlu0 %v1710, 96
        %v1712 = vpop.permute.xlu0 %1711
        %v1714 = vsel %vm288, %v1700, %v1704
        %v1715 = vsel %vm1594, %v1714, %v1708
        %vm1716 = vcmask 785408
        %v1717 = vsel %vm1716, %v1715, %v1712
        %v1719 = vrot.slane %v1717, 3
        %vm1721 = vcmask 1040384
        %v1722 = vsel %vm1721, %v1717, %v1719
        %1723 = vst [vmem:[%s266] sm:$0x3] %v1722
        %p1724 = scmp.lt.s32.totalorder %s14, 1
        %s1725 = scalar_select %p1724, %s14, 1
        %s1726 = smul.addr %s1725, 2
        %s1727 = scalar_lea.vmem %s3, %s1726
        // Predicated region
        $region109: #{transformer_decoder_layer.1} parent=99 // pred_check
          %p1728 = pneg %p105
        $region110: #{transformer_decoder_layer.1} parent=99 // pred_check_branch
          %1730 = sbr.rel (%p1728) target = $region112
        $region111: #{transformer_decoder_layer.1} parent=99 // pred_region
          _
        $region112: #{transformer_decoder_layer.1} parent=99 // pred_fallthru
          _
      $region100: #{transformer_decoder_layer.1} parent=5 // pred_fallthru
        _
      %p1731 = scmp.le.s32.totalorder 2, %s9
      // Predicated region
      $region113: #{transformer_decoder_layer.1} parent=5 // pred_check
        %p1732 = pneg %p1731
      $region114: #{transformer_decoder_layer.1} parent=5 // pred_check_branch
        %1734 = sbr.rel (%p1732) target = $region116
      $region115: #{transformer_decoder_layer.1} parent=5 // pred_region
        %s1735 = ssub.s32 %s9, 2
        // Predicated region
        $region117: #{transformer_decoder_layer.1} parent=115 // pred_check
          %p1736 = pneg %p111
        $region118: #{transformer_decoder_layer.1} parent=115 // pred_check_branch
          %1738 = sbr.rel (%p1736) target = $region120
        $region119: #{transformer_decoder_layer.1} parent=115 // pred_region
          %p1739 = scmp.lt.s32.totalorder %s15, 1
          %s1740 = scalar_select %p1739, %s15, 1
          %s1741 = smul.addr %s1740, 2
          %s1742 = scalar_lea.vmem %s3, %s1741
        $region120: #{transformer_decoder_layer.1} parent=115 // pred_fallthru
          _
      $region116: #{transformer_decoder_layer.1} parent=5 // pred_fallthru
        _
    $region6: #{transformer_decoder_layer.1} parent=1 // loop_footer
      %s13 = sadd.s32 1, %s9
    $region7: #{transformer_decoder_layer.1} parent=1 // loop_footer_branch
      %8 = sbr.rel target = $region3
    $region8: #{transformer_decoder_layer.1} parent=1 // loop_exit
      _

</llo_original>
